<compile_context>
chip_gen: v5e
topology: v5e:2x2
jax: 0.10.0
libtpu: 0.0.40
codegen_flags: <defaults>
</compile_context>

<pallas_src>
import functools

import jax
import jax.numpy as jnp
from jax.experimental import pallas as pl
from jax.experimental.pallas import tpu as pltpu

LANE = 128          # TPU lane width; classifier output padded to this many cols.
DEFAULT_TILE_B = 128  # batch rows per grid step (fills MXU rows on v5e).


def _round_up(n, m):
    return (n + m - 1) // m * m


def _ensemble_kernel(x_ref, w0_ref, b0_ref, wb_ref, bb_ref, wcf_ref, bcf_ref,
                     o_ref, *, n_res_blocks, n_sub):
    """Fused forward for one batch tile: block0 -> residual blocks -> classifier.

    x_ref:   (TILE_B, in_features)  f32   (per-grid-step batch tile)
    w0_ref:  (in_features, width)   bf16  (VMEM-resident, constant index map)
    b0_ref:  (1, width)             f32
    wb_ref:  (n_res>=1, width, width) bf16 (dummy size-1 when depth == 1)
    bb_ref:  (n_res>=1, 1, width)     f32
    wcf_ref: (width, LANE)          bf16  (lane-padded classifier weights)
    bcf_ref: (1, LANE)              f32
    o_ref:   (TILE_B, LANE)         f32   (lane-dense output tile)

    The tile is split into `n_sub` independent row sub-chains; each is a strict
    serial matmul chain, but the chains are independent so the scheduler can
    interleave them and hide MXU result-FIFO latency.
    """
    w_dtype = w0_ref.dtype
    tile_b = x_ref.shape[0]
    sub_b = tile_b // n_sub

    for s in range(n_sub):                       # static unroll over sub-tiles
        r0 = s * sub_b                           # static, 8-aligned

        # --- block 0: y = relu(x @ W0 + b0), no residual ---------------------
        x = x_ref[pl.ds(r0, sub_b), :]
        y = jnp.dot(x.astype(w_dtype), w0_ref[...],
                    preferred_element_type=jnp.float32)
        y = jnp.maximum(y + b0_ref[...], 0.0)

        # --- residual blocks: y = relu(y @ Wi + bi) + y -----------------------
        for i in range(n_res_blocks):            # static unroll (depth small)
            z = jnp.dot(y.astype(w_dtype), wb_ref[i],
                        preferred_element_type=jnp.float32)
            z = jnp.maximum(z + bb_ref[i], 0.0)
            y = z + y

        # --- classifier (lane-padded output columns) --------------------------
        logits = jnp.dot(y.astype(w_dtype), wcf_ref[...],
                         preferred_element_type=jnp.float32)
        o_ref[pl.ds(r0, sub_b), :] = logits + bcf_ref[...]


def ensemble_forward(x_nchw, params, *, num_classes, tile_b=None):
    """Flatten NCHW input, run the batch-gridded fused kernel, slice real classes."""
    w0, b0, wb, bb, wcf_p, bcf_p = params
    assert num_classes <= LANE, "classifier padding assumes num_classes <= 128"

    B = x_nchw.shape[0]
    x = x_nchw.reshape(B, -1)                    # glue: flatten, row-major
    in_features = x.shape[1]
    width = w0.shape[1]

    n_res = wb.shape[0]
    if n_res == 0:
        # depth == 1: never pass zero-sized operands into pallas_call.
        wb = jnp.zeros((1, width, width), w0.dtype)
        bb = jnp.zeros((1, 1, width), jnp.float32)

    # Batch tiling: 128 rows/step when available, else the whole (8-aligned) batch.
    if tile_b is None:
        tile_b = min(DEFAULT_TILE_B, _round_up(B, 8))
    Bp = _round_up(B, tile_b)
    if Bp != B:
        x = jnp.pad(x, ((0, Bp - B), (0, 0)))
    n_sub = 2 if tile_b % 16 == 0 else 1         # sub-tile rows must be 8-aligned

    grid = (Bp // tile_b,)
    kernel = functools.partial(_ensemble_kernel,
                               n_res_blocks=n_res, n_sub=n_sub)

    out_padded = pl.pallas_call(
        kernel,
        out_shape=jax.ShapeDtypeStruct((Bp, LANE), jnp.float32),
        grid=grid,
        in_specs=[
            # batch tile marches with the grid
            pl.BlockSpec((tile_b, in_features), lambda i: (i, 0)),
            # weights/biases: constant block index -> VMEM-resident across steps
            pl.BlockSpec((in_features, width), lambda i: (0, 0)),
            pl.BlockSpec((1, width), lambda i: (0, 0)),
            pl.BlockSpec(wb.shape, lambda i: (0, 0, 0)),
            pl.BlockSpec(bb.shape, lambda i: (0, 0, 0)),
            pl.BlockSpec((width, LANE), lambda i: (0, 0)),
            pl.BlockSpec((1, LANE), lambda i: (0, 0)),
        ],
        out_specs=pl.BlockSpec((tile_b, LANE), lambda i: (i, 0)),
        compiler_params=pltpu.CompilerParams(
            dimension_semantics=("parallel",)),   # shard batch steps across TCs
    )(x, w0, b0, wb, bb, wcf_p, bcf_p)

    return out_padded[:B, :num_classes]


def init_ensemble_params(key, in_features, width, depth, num_classes,
                         weight_dtype=jnp.bfloat16):
    """Deterministic synthetic params, pre-stacked / lane-padded for the kernel.

    Weights in `weight_dtype` (bf16 default: MXU-native, halves DMA bytes),
    biases in f32.  Classifier weights/bias zero-padded to LANE output columns.
    """
    assert depth >= 1
    assert num_classes <= LANE
    ks = jax.random.split(key, 2 * (depth + 1))

    # block 0 (in_features -> width)
    w0 = (jax.random.normal(ks[0], (in_features, width), jnp.float32)
          / jnp.sqrt(in_features)).astype(weight_dtype)
    b0 = jax.random.normal(ks[1], (1, width), jnp.float32) * 0.01

    # residual blocks (width -> width), stacked
    if depth > 1:
        wb = jnp.stack([
            (jax.random.normal(ks[2 + 2 * i], (width, width), jnp.float32)
             / jnp.sqrt(width)).astype(weight_dtype)
            for i in range(depth - 1)
        ])
        bb = jnp.stack([
            jax.random.normal(ks[3 + 2 * i], (1, width), jnp.float32) * 0.01
            for i in range(depth - 1)
        ])
    else:
        wb = jnp.zeros((0, width, width), weight_dtype)
        bb = jnp.zeros((0, 1, width), jnp.float32)

    # classifier (width -> num_classes), zero-padded to LANE output columns
    wcf = (jax.random.normal(ks[2 * depth], (width, num_classes), jnp.float32)
           / jnp.sqrt(width)).astype(weight_dtype)
    bcf = jax.random.normal(ks[2 * depth + 1], (1, num_classes),
                            jnp.float32) * 0.01
    wcf_p = jnp.zeros((width, LANE), weight_dtype).at[:, :num_classes].set(wcf)
    bcf_p = jnp.zeros((1, LANE), jnp.float32).at[:, :num_classes].set(bcf)

    return (w0, b0, wb, bb, wcf_p, bcf_p)


def ref_forward(x_nchw, params, num_classes):
    """Pure-JAX reference with the same dtype semantics (bf16 matmul, f32 acc)."""
    w0, b0, wb, bb, wcf_p, bcf_p = params
    B = x_nchw.shape[0]
    wd = w0.dtype
    y = x_nchw.reshape(B, -1)
    y = jnp.maximum(
        jnp.dot(y.astype(wd), w0, preferred_element_type=jnp.float32) + b0, 0.0)
    for i in range(wb.shape[0]):
        z = jnp.maximum(
            jnp.dot(y.astype(wd), wb[i], preferred_element_type=jnp.float32)
            + bb[i], 0.0)
        y = z + y
    logits = jnp.dot(y.astype(wd), wcf_p,
                     preferred_element_type=jnp.float32) + bcf_p
    return logits[:, :num_classes]


if __name__ == "__main__":
    # Shapes consistent with the module: input_size=(3,16,16), width=128,
    # num_classes=10.  Batch 256 -> grid of two 128-row tiles (exercises the
    # parallel batch grid); a second tiny run checks the depth==1 / small-B path.
    key = jax.random.PRNGKey(0)

    # --- main config: depth=4, batch=256 -------------------------------------
    B, C, H, W = 256, 3, 16, 16
    depth, width, num_classes = 4, 128, 10
    key, kx, kp = jax.random.split(key, 3)
    x = jax.random.normal(kx, (B, C, H, W), jnp.float32)
    params = init_ensemble_params(kp, C * H * W, width, depth, num_classes)

    logits = ensemble_forward(x, params, num_classes=num_classes)
    jax.block_until_ready(logits)
    ref = ref_forward(x, params, num_classes)
    assert logits.shape == (B, num_classes)
    err = float(jnp.max(jnp.abs(logits - ref)))
    assert jnp.allclose(logits, ref, atol=5e-3, rtol=5e-3), (
        f"mismatch vs reference (depth=4): max abs err {err}")

    # --- edge config: depth=1 (no residual blocks), small batch ---------------
    B2 = 8
    key, kx2, kp2 = jax.random.split(key, 3)
    x2 = jax.random.normal(kx2, (B2, C, H, W), jnp.float32)
    params2 = init_ensemble_params(kp2, C * H * W, width, 1, num_classes)
    logits2 = ensemble_forward(x2, params2, num_classes=num_classes)
    jax.block_until_ready(logits2)
    ref2 = ref_forward(x2, params2, num_classes)
    assert logits2.shape == (B2, num_classes)
    err2 = float(jnp.max(jnp.abs(logits2 - ref2)))
    assert jnp.allclose(logits2, ref2, atol=5e-3, rtol=5e-3), (
        f"mismatch vs reference (depth=1): max abs err {err2}")

    print("KERNEL_OK")
</pallas_src>

<mosaic_0001>
module attributes {stable_mosaic.version = 11 : i64} {
  func.func @_ensemble_kernel(%arg0: i32, %arg1: memref<128x768xf32, #tpu.memory_space<vmem>>, %arg2: memref<768x128xbf16, #tpu.memory_space<vmem>>, %arg3: memref<1x128xf32, #tpu.memory_space<vmem>>, %arg4: memref<3x128x128xbf16, #tpu.memory_space<vmem>>, %arg5: memref<3x1x128xf32, #tpu.memory_space<vmem>>, %arg6: memref<128x128xbf16, #tpu.memory_space<vmem>>, %arg7: memref<1x128xf32, #tpu.memory_space<vmem>>, %arg8: memref<128x128xf32, #tpu.memory_space<vmem>>) attributes {dimension_semantics = [#tpu.dimension_semantics<parallel>], iteration_bounds = array<i64: 2>, scalar_prefetch = 0 : i64, scratch_operands = 0 : i64, tpu.core_type = #tpu.core_type<tc>, window_params = [{transform_indices = @transform_0, window_bounds = array<i64: 128, 768>}, {pipeline_mode = #tpu.pipeline_mode<synchronous>, transform_indices = @transform_1, window_bounds = array<i64: 768, 128>}, {pipeline_mode = #tpu.pipeline_mode<synchronous>, transform_indices = @transform_2, window_bounds = array<i64: 1, 128>}, {pipeline_mode = #tpu.pipeline_mode<synchronous>, transform_indices = @transform_3, window_bounds = array<i64: 3, 128, 128>}, {pipeline_mode = #tpu.pipeline_mode<synchronous>, transform_indices = @transform_4, window_bounds = array<i64: 3, 1, 128>}, {pipeline_mode = #tpu.pipeline_mode<synchronous>, transform_indices = @transform_5, window_bounds = array<i64: 128, 128>}, {pipeline_mode = #tpu.pipeline_mode<synchronous>, transform_indices = @transform_6, window_bounds = array<i64: 1, 128>}, {transform_indices = @transform_7, window_bounds = array<i64: 128, 128>}]} {
    %c0 = arith.constant 0 : index
    %c0_0 = arith.constant 0 : index
    %0 = vector.load %arg1[%c0, %c0_0] : memref<128x768xf32, #tpu.memory_space<vmem>>, vector<64x768xf32>
    %1 = arith.truncf %0 : vector<64x768xf32> to vector<64x768xbf16>
    %c0_1 = arith.constant 0 : index
    %c0_2 = arith.constant 0 : index
    %2 = vector.load %arg2[%c0_1, %c0_2] : memref<768x128xbf16, #tpu.memory_space<vmem>>, vector<768x128xbf16>
    %cst = arith.constant dense<0.000000e+00> : vector<64x128xf32>
    %3 = tpu.matmul %1, %2, %cst {dimension_numbers = #tpu.dot_dimension_numbers<[1], [0], [0], [1], [0, 0, 1, 1], [], []>} : vector<64x768xbf16>, vector<768x128xbf16>, vector<64x128xf32> -> vector<64x128xf32>
    %c0_3 = arith.constant 0 : index
    %c0_4 = arith.constant 0 : index
    %4 = vector.load %arg3[%c0_3, %c0_4] : memref<1x128xf32, #tpu.memory_space<vmem>>, vector<1x128xf32>
    %5 = vector.broadcast %4 : vector<1x128xf32> to vector<64x128xf32>
    %6 = arith.addf %3, %5 : vector<64x128xf32>
    %cst_5 = arith.constant 0.000000e+00 : f32
    %7 = vector.broadcast %cst_5 : f32 to vector<64x128xf32>
    %8 = arith.maximumf %6, %7 : vector<64x128xf32>
    %9 = arith.truncf %8 : vector<64x128xf32> to vector<64x128xbf16>
    %c0_6 = arith.constant 0 : index
    %c0_7 = arith.constant 0 : index
    %c0_8 = arith.constant 0 : index
    %10 = vector.load %arg4[%c0_6, %c0_7, %c0_8] : memref<3x128x128xbf16, #tpu.memory_space<vmem>>, vector<1x128x128xbf16>
    %11 = vector.shape_cast %10 : vector<1x128x128xbf16> to vector<128x128xbf16>
    %cst_9 = arith.constant dense<0.000000e+00> : vector<64x128xf32>
    %12 = tpu.matmul %9, %11, %cst_9 {dimension_numbers = #tpu.dot_dimension_numbers<[1], [0], [0], [1], [0, 0, 1, 1], [], []>} : vector<64x128xbf16>, vector<128x128xbf16>, vector<64x128xf32> -> vector<64x128xf32>
    %c0_10 = arith.constant 0 : index
    %c0_11 = arith.constant 0 : index
    %c0_12 = arith.constant 0 : index
    %13 = vector.load %arg5[%c0_10, %c0_11, %c0_12] : memref<3x1x128xf32, #tpu.memory_space<vmem>>, vector<1x1x128xf32>
    %14 = vector.shape_cast %13 : vector<1x1x128xf32> to vector<1x128xf32>
    %15 = vector.broadcast %14 : vector<1x128xf32> to vector<64x128xf32>
    %16 = arith.addf %12, %15 : vector<64x128xf32>
    %cst_13 = arith.constant 0.000000e+00 : f32
    %17 = vector.broadcast %cst_13 : f32 to vector<64x128xf32>
    %18 = arith.maximumf %16, %17 : vector<64x128xf32>
    %19 = arith.addf %18, %8 : vector<64x128xf32>
    %20 = arith.truncf %19 : vector<64x128xf32> to vector<64x128xbf16>
    %c1 = arith.constant 1 : index
    %c0_14 = arith.constant 0 : index
    %c0_15 = arith.constant 0 : index
    %21 = vector.load %arg4[%c1, %c0_14, %c0_15] : memref<3x128x128xbf16, #tpu.memory_space<vmem>>, vector<1x128x128xbf16>
    %22 = vector.shape_cast %21 : vector<1x128x128xbf16> to vector<128x128xbf16>
    %cst_16 = arith.constant dense<0.000000e+00> : vector<64x128xf32>
    %23 = tpu.matmul %20, %22, %cst_16 {dimension_numbers = #tpu.dot_dimension_numbers<[1], [0], [0], [1], [0, 0, 1, 1], [], []>} : vector<64x128xbf16>, vector<128x128xbf16>, vector<64x128xf32> -> vector<64x128xf32>
    %c1_17 = arith.constant 1 : index
    %c0_18 = arith.constant 0 : index
    %c0_19 = arith.constant 0 : index
    %24 = vector.load %arg5[%c1_17, %c0_18, %c0_19] : memref<3x1x128xf32, #tpu.memory_space<vmem>>, vector<1x1x128xf32>
    %25 = vector.shape_cast %24 : vector<1x1x128xf32> to vector<1x128xf32>
    %26 = vector.broadcast %25 : vector<1x128xf32> to vector<64x128xf32>
    %27 = arith.addf %23, %26 : vector<64x128xf32>
    %cst_20 = arith.constant 0.000000e+00 : f32
    %28 = vector.broadcast %cst_20 : f32 to vector<64x128xf32>
    %29 = arith.maximumf %27, %28 : vector<64x128xf32>
    %30 = arith.addf %29, %19 : vector<64x128xf32>
    %31 = arith.truncf %30 : vector<64x128xf32> to vector<64x128xbf16>
    %c2 = arith.constant 2 : index
    %c0_21 = arith.constant 0 : index
    %c0_22 = arith.constant 0 : index
    %32 = vector.load %arg4[%c2, %c0_21, %c0_22] : memref<3x128x128xbf16, #tpu.memory_space<vmem>>, vector<1x128x128xbf16>
    %33 = vector.shape_cast %32 : vector<1x128x128xbf16> to vector<128x128xbf16>
    %cst_23 = arith.constant dense<0.000000e+00> : vector<64x128xf32>
    %34 = tpu.matmul %31, %33, %cst_23 {dimension_numbers = #tpu.dot_dimension_numbers<[1], [0], [0], [1], [0, 0, 1, 1], [], []>} : vector<64x128xbf16>, vector<128x128xbf16>, vector<64x128xf32> -> vector<64x128xf32>
    %c2_24 = arith.constant 2 : index
    %c0_25 = arith.constant 0 : index
    %c0_26 = arith.constant 0 : index
    %35 = vector.load %arg5[%c2_24, %c0_25, %c0_26] : memref<3x1x128xf32, #tpu.memory_space<vmem>>, vector<1x1x128xf32>
    %36 = vector.shape_cast %35 : vector<1x1x128xf32> to vector<1x128xf32>
    %37 = vector.broadcast %36 : vector<1x128xf32> to vector<64x128xf32>
    %38 = arith.addf %34, %37 : vector<64x128xf32>
    %cst_27 = arith.constant 0.000000e+00 : f32
    %39 = vector.broadcast %cst_27 : f32 to vector<64x128xf32>
    %40 = arith.maximumf %38, %39 : vector<64x128xf32>
    %41 = arith.addf %40, %30 : vector<64x128xf32>
    %42 = arith.truncf %41 : vector<64x128xf32> to vector<64x128xbf16>
    %c0_28 = arith.constant 0 : index
    %c0_29 = arith.constant 0 : index
    %43 = vector.load %arg6[%c0_28, %c0_29] : memref<128x128xbf16, #tpu.memory_space<vmem>>, vector<128x128xbf16>
    %cst_30 = arith.constant dense<0.000000e+00> : vector<64x128xf32>
    %44 = tpu.matmul %42, %43, %cst_30 {dimension_numbers = #tpu.dot_dimension_numbers<[1], [0], [0], [1], [0, 0, 1, 1], [], []>} : vector<64x128xbf16>, vector<128x128xbf16>, vector<64x128xf32> -> vector<64x128xf32>
    %c0_31 = arith.constant 0 : index
    %c0_32 = arith.constant 0 : index
    %45 = vector.load %arg7[%c0_31, %c0_32] : memref<1x128xf32, #tpu.memory_space<vmem>>, vector<1x128xf32>
    %46 = vector.broadcast %45 : vector<1x128xf32> to vector<64x128xf32>
    %47 = arith.addf %44, %46 : vector<64x128xf32>
    %c0_33 = arith.constant 0 : index
    %c0_34 = arith.constant 0 : index
    %48 = vector.load %arg8[%c0_33, %c0_34] : memref<128x128xf32, #tpu.memory_space<vmem>>, vector<64x128xf32>
    tpu.vector_store %arg8[%c0_33, %c0_34], %47 {strides = array<i32>} : memref<128x128xf32, #tpu.memory_space<vmem>>, vector<64x128xf32>,
    %c64 = arith.constant 64 : index
    %c0_35 = arith.constant 0 : index
    %49 = vector.load %arg1[%c64, %c0_35] : memref<128x768xf32, #tpu.memory_space<vmem>>, vector<64x768xf32>
    %50 = arith.truncf %49 : vector<64x768xf32> to vector<64x768xbf16>
    %c0_36 = arith.constant 0 : index
    %c0_37 = arith.constant 0 : index
    %51 = vector.load %arg2[%c0_36, %c0_37] : memref<768x128xbf16, #tpu.memory_space<vmem>>, vector<768x128xbf16>
    %cst_38 = arith.constant dense<0.000000e+00> : vector<64x128xf32>
    %52 = tpu.matmul %50, %51, %cst_38 {dimension_numbers = #tpu.dot_dimension_numbers<[1], [0], [0], [1], [0, 0, 1, 1], [], []>} : vector<64x768xbf16>, vector<768x128xbf16>, vector<64x128xf32> -> vector<64x128xf32>
    %c0_39 = arith.constant 0 : index
    %c0_40 = arith.constant 0 : index
    %53 = vector.load %arg3[%c0_39, %c0_40] : memref<1x128xf32, #tpu.memory_space<vmem>>, vector<1x128xf32>
    %54 = vector.broadcast %53 : vector<1x128xf32> to vector<64x128xf32>
    %55 = arith.addf %52, %54 : vector<64x128xf32>
    %cst_41 = arith.constant 0.000000e+00 : f32
    %56 = vector.broadcast %cst_41 : f32 to vector<64x128xf32>
    %57 = arith.maximumf %55, %56 : vector<64x128xf32>
    %58 = arith.truncf %57 : vector<64x128xf32> to vector<64x128xbf16>
    %c0_42 = arith.constant 0 : index
    %c0_43 = arith.constant 0 : index
    %c0_44 = arith.constant 0 : index
    %59 = vector.load %arg4[%c0_42, %c0_43, %c0_44] : memref<3x128x128xbf16, #tpu.memory_space<vmem>>, vector<1x128x128xbf16>
    %60 = vector.shape_cast %59 : vector<1x128x128xbf16> to vector<128x128xbf16>
    %cst_45 = arith.constant dense<0.000000e+00> : vector<64x128xf32>
    %61 = tpu.matmul %58, %60, %cst_45 {dimension_numbers = #tpu.dot_dimension_numbers<[1], [0], [0], [1], [0, 0, 1, 1], [], []>} : vector<64x128xbf16>, vector<128x128xbf16>, vector<64x128xf32> -> vector<64x128xf32>
    %c0_46 = arith.constant 0 : index
    %c0_47 = arith.constant 0 : index
    %c0_48 = arith.constant 0 : index
    %62 = vector.load %arg5[%c0_46, %c0_47, %c0_48] : memref<3x1x128xf32, #tpu.memory_space<vmem>>, vector<1x1x128xf32>
    %63 = vector.shape_cast %62 : vector<1x1x128xf32> to vector<1x128xf32>
    %64 = vector.broadcast %63 : vector<1x128xf32> to vector<64x128xf32>
    %65 = arith.addf %61, %64 : vector<64x128xf32>
    %cst_49 = arith.constant 0.000000e+00 : f32
    %66 = vector.broadcast %cst_49 : f32 to vector<64x128xf32>
    %67 = arith.maximumf %65, %66 : vector<64x128xf32>
    %68 = arith.addf %67, %57 : vector<64x128xf32>
    %69 = arith.truncf %68 : vector<64x128xf32> to vector<64x128xbf16>
    %c1_50 = arith.constant 1 : index
    %c0_51 = arith.constant 0 : index
    %c0_52 = arith.constant 0 : index
    %70 = vector.load %arg4[%c1_50, %c0_51, %c0_52] : memref<3x128x128xbf16, #tpu.memory_space<vmem>>, vector<1x128x128xbf16>
    %71 = vector.shape_cast %70 : vector<1x128x128xbf16> to vector<128x128xbf16>
    %cst_53 = arith.constant dense<0.000000e+00> : vector<64x128xf32>
    %72 = tpu.matmul %69, %71, %cst_53 {dimension_numbers = #tpu.dot_dimension_numbers<[1], [0], [0], [1], [0, 0, 1, 1], [], []>} : vector<64x128xbf16>, vector<128x128xbf16>, vector<64x128xf32> -> vector<64x128xf32>
    %c1_54 = arith.constant 1 : index
    %c0_55 = arith.constant 0 : index
    %c0_56 = arith.constant 0 : index
    %73 = vector.load %arg5[%c1_54, %c0_55, %c0_56] : memref<3x1x128xf32, #tpu.memory_space<vmem>>, vector<1x1x128xf32>
    %74 = vector.shape_cast %73 : vector<1x1x128xf32> to vector<1x128xf32>
    %75 = vector.broadcast %74 : vector<1x128xf32> to vector<64x128xf32>
    %76 = arith.addf %72, %75 : vector<64x128xf32>
    %cst_57 = arith.constant 0.000000e+00 : f32
    %77 = vector.broadcast %cst_57 : f32 to vector<64x128xf32>
    %78 = arith.maximumf %76, %77 : vector<64x128xf32>
    %79 = arith.addf %78, %68 : vector<64x128xf32>
    %80 = arith.truncf %79 : vector<64x128xf32> to vector<64x128xbf16>
    %c2_58 = arith.constant 2 : index
    %c0_59 = arith.constant 0 : index
    %c0_60 = arith.constant 0 : index
    %81 = vector.load %arg4[%c2_58, %c0_59, %c0_60] : memref<3x128x128xbf16, #tpu.memory_space<vmem>>, vector<1x128x128xbf16>
    %82 = vector.shape_cast %81 : vector<1x128x128xbf16> to vector<128x128xbf16>
    %cst_61 = arith.constant dense<0.000000e+00> : vector<64x128xf32>
    %83 = tpu.matmul %80, %82, %cst_61 {dimension_numbers = #tpu.dot_dimension_numbers<[1], [0], [0], [1], [0, 0, 1, 1], [], []>} : vector<64x128xbf16>, vector<128x128xbf16>, vector<64x128xf32> -> vector<64x128xf32>
    %c2_62 = arith.constant 2 : index
    %c0_63 = arith.constant 0 : index
    %c0_64 = arith.constant 0 : index
    %84 = vector.load %arg5[%c2_62, %c0_63, %c0_64] : memref<3x1x128xf32, #tpu.memory_space<vmem>>, vector<1x1x128xf32>
    %85 = vector.shape_cast %84 : vector<1x1x128xf32> to vector<1x128xf32>
    %86 = vector.broadcast %85 : vector<1x128xf32> to vector<64x128xf32>
    %87 = arith.addf %83, %86 : vector<64x128xf32>
    %cst_65 = arith.constant 0.000000e+00 : f32
    %88 = vector.broadcast %cst_65 : f32 to vector<64x128xf32>
    %89 = arith.maximumf %87, %88 : vector<64x128xf32>
    %90 = arith.addf %89, %79 : vector<64x128xf32>
    %91 = arith.truncf %90 : vector<64x128xf32> to vector<64x128xbf16>
    %c0_66 = arith.constant 0 : index
    %c0_67 = arith.constant 0 : index
    %92 = vector.load %arg6[%c0_66, %c0_67] : memref<128x128xbf16, #tpu.memory_space<vmem>>, vector<128x128xbf16>
    %cst_68 = arith.constant dense<0.000000e+00> : vector<64x128xf32>
    %93 = tpu.matmul %91, %92, %cst_68 {dimension_numbers = #tpu.dot_dimension_numbers<[1], [0], [0], [1], [0, 0, 1, 1], [], []>} : vector<64x128xbf16>, vector<128x128xbf16>, vector<64x128xf32> -> vector<64x128xf32>
    %c0_69 = arith.constant 0 : index
    %c0_70 = arith.constant 0 : index
    %94 = vector.load %arg7[%c0_69, %c0_70] : memref<1x128xf32, #tpu.memory_space<vmem>>, vector<1x128xf32>
    %95 = vector.broadcast %94 : vector<1x128xf32> to vector<64x128xf32>
    %96 = arith.addf %93, %95 : vector<64x128xf32>
    %c64_71 = arith.constant 64 : index
    %c0_72 = arith.constant 0 : index
    %97 = vector.load %arg8[%c64_71, %c0_72] : memref<128x128xf32, #tpu.memory_space<vmem>>, vector<64x128xf32>
    tpu.vector_store %arg8[%c64_71, %c0_72], %96 {strides = array<i32>} : memref<128x128xf32, #tpu.memory_space<vmem>>, vector<64x128xf32>,
    return
  }
  func.func @transform_0(%arg0: i32) -> (i32, i32) {
    %c0_i32 = arith.constant 0 : i32
    %c0_i32_0 = arith.constant 0 : i32
    return %arg0, %c0_i32 : i32, i32
  }
  func.func @transform_1(%arg0: i32) -> (i32, i32) {
    %c0_i32 = arith.constant 0 : i32
    %c0_i32_0 = arith.constant 0 : i32
    %c0_i32_1 = arith.constant 0 : i32
    return %c0_i32, %c0_i32_0 : i32, i32
  }
  func.func @transform_2(%arg0: i32) -> (i32, i32) {
    %c0_i32 = arith.constant 0 : i32
    %c0_i32_0 = arith.constant 0 : i32
    %c0_i32_1 = arith.constant 0 : i32
    return %c0_i32, %c0_i32_0 : i32, i32
  }
  func.func @transform_3(%arg0: i32) -> (i32, i32, i32) {
    %c0_i32 = arith.constant 0 : i32
    %c0_i32_0 = arith.constant 0 : i32
    %c0_i32_1 = arith.constant 0 : i32
    %c0_i32_2 = arith.constant 0 : i32
    return %c0_i32, %c0_i32_0, %c0_i32_1 : i32, i32, i32
  }
  func.func @transform_4(%arg0: i32) -> (i32, i32, i32) {
    %c0_i32 = arith.constant 0 : i32
    %c0_i32_0 = arith.constant 0 : i32
    %c0_i32_1 = arith.constant 0 : i32
    %c0_i32_2 = arith.constant 0 : i32
    return %c0_i32, %c0_i32_0, %c0_i32_1 : i32, i32, i32
  }
  func.func @transform_5(%arg0: i32) -> (i32, i32) {
    %c0_i32 = arith.constant 0 : i32
    %c0_i32_0 = arith.constant 0 : i32
    %c0_i32_1 = arith.constant 0 : i32
    return %c0_i32, %c0_i32_0 : i32, i32
  }
  func.func @transform_6(%arg0: i32) -> (i32, i32) {
    %c0_i32 = arith.constant 0 : i32
    %c0_i32_0 = arith.constant 0 : i32
    %c0_i32_1 = arith.constant 0 : i32
    return %c0_i32, %c0_i32_0 : i32, i32
  }
  func.func @transform_7(%arg0: i32) -> (i32, i32) {
    %c0_i32 = arith.constant 0 : i32
    %c0_i32_0 = arith.constant 0 : i32
    return %arg0, %c0_i32 : i32, i32
  }
}

</mosaic_0001>

<llo_original>
// kernel: tpu_custom_call.1
$region0: #{tpu_custom_call.1}
  #allocation0 [shape = 'u32[]', space=smem, size = 0x4, offset = 0x4, fixed_abs, tag = 'smem constant byte address 0x4 - core index']
  #allocation1 [shape = 'u32[72,128]{1,0:T(1,128)}', space=vmem, size = 0x9000, scoped, tag = 'internal scratch']
  %s0 = inlined_call_operand.hbm [shape: f32[256,768], index: 0, kind: input, shape index: {}]
  %s1 = inlined_call_operand.hbm [shape: bf16[768,128], index: 1, kind: input, shape index: {}]
  %s2 = inlined_call_operand.hbm [shape: f32[1,128], index: 2, kind: input, shape index: {}]
  %s3 = inlined_call_operand.hbm [shape: bf16[3,128,128], index: 3, kind: input, shape index: {}]
  %s4 = inlined_call_operand.vmem [shape: f32[3,1,128], index: 4, kind: input, shape index: {}]
  %s5 = inlined_call_operand.hbm [shape: bf16[128,128], index: 5, kind: input, shape index: {}]
  %s6 = inlined_call_operand.vmem [shape: f32[1,128], index: 6, kind: input, shape index: {}]
  %s7 = inlined_call_operand.hbm [shape: f32[256,128], index: 7, kind: output, shape index: {}]
  %s8 = sld [smem:[#allocation0]]
  $region81: #{tpu_custom_call.1} parent=0
    _
  %s10 = ssub.s32 1, %s8
  %s11 = scalar_select 0, %s10, %s8
  $region1: #{tpu_custom_call.1} parent=0
    #allocation2 [shape = 'u8[786432]{0}', space=vmem, size = 0xc0000, scoped, tag = 'input window, operand 0']
    #allocation3 [shape = 's32[2]{0}', space=sflag, size = 0x8, scoped, tag = 'scoped memory for tpu_custom_call.1']
    #allocation4 [shape = 's32[2]{0}', space=sflag, size = 0x8, scoped, tag = 'scoped memory for tpu_custom_call.1']
    #allocation5 [shape = 'u8[196608]{0}', space=vmem, size = 0x30000, scoped, tag = 'input window, operand 1, single buffered']
    #allocation6 [shape = 's32[1]{0}', space=sflag, size = 0x4, scoped, tag = 'scoped memory for tpu_custom_call.1']
    #allocation7 [shape = 'u8[512]{0}', space=vmem, size = 0x400, scoped, tag = 'input window, operand 2, single buffered']
    #allocation8 [shape = 'u8[98304]{0}', space=vmem, size = 0x18000, scoped, tag = 'input window, operand 3, single buffered']
    #allocation9 [shape = 's32[1]{0}', space=sflag, size = 0x4, scoped, tag = 'scoped memory for tpu_custom_call.1']
    #allocation10 [shape = 'u8[32768]{0}', space=vmem, size = 0x8000, scoped, tag = 'input window, operand 5, single buffered']
    #allocation11 [shape = 'u8[131072]{0}', space=vmem, size = 0x20000, scoped, tag = 'output window, operand 0']
    %12 = vsyncpa [#allocation3], 0
    %s13 = scalar_lea.sflag [#allocation3], 1
    %14 = vsyncpa %s13, 0
    %15 = vsyncpa [#allocation6], 0
    %16 = vsyncpa [#allocation9], 0
    %17 = vsyncpa [#allocation4], 0
    %s18 = scalar_lea.sflag [#allocation4], 1
    %19 = vsyncpa %s18, 0
    loop: start=0, step=1, limit=4
    $region2: #{tpu_custom_call.1} parent=1 // loop_pre_header
      _
    $region3: #{tpu_custom_call.1} parent=1 // loop_header
      %s21 = sphi 0, %s25
      %p22 = scmp.ge.s32.totalorder %s21, 4
      %s31 = sphi 0, %s33
      %s34 = sphi 0, %s31
      %s35 = sphi 0, %s34
      %s51 = sphi 0, %s35
      %s55 = sphi 0, %s55
      %s57 = sphi 0, %s55
      %s58 = sphi 0, %s57
      %s72 = sphi 0, %s58
      %s76 = sphi 0, %s76
      %s78 = sphi 0, %s76
      %s79 = sphi 0, %s78
      %s93 = sphi 0, %s79
      %s97 = sphi 0, %s97
      %s99 = sphi 0, %s97
      %s100 = sphi 0, %s99
      %s114 = sphi 0, %s100
      %s118 = sphi 0, %s118
      %s120 = sphi 0, %s118
      %s121 = sphi 0, %s120
      %s135 = sphi 0, %s121
      %s139 = sphi 0, %s139
      %s141 = sphi 0, %s139
      %s142 = sphi 0, %s141
      %s156 = sphi 0, %s142
      %s160 = sphi 0, %s160
      %s162 = sphi 0, %s160
      %s163 = sphi 0, %s162
      %s177 = sphi 0, %s163
      %s183 = sphi 0, %s185
      %s186 = sphi 0, %s183
      %s187 = sphi 0, %s186
      %s203 = sphi 0, %s187
    $region4: #{tpu_custom_call.1} parent=1 // loop_header_branch
      %24 = sbr.rel (%p22) target = $region8
    $region5: #{tpu_custom_call.1} parent=1 // loop_body
      %s26 = ssub.s32 %s21, 1
      %s27 = ssub.s32 %s21, 2
      %s28 = sadd.s32 %s21, 1
      %s29 = ssub.s32 %s21, %s28
      %p30 = scmp.eq.s32.totalorder %s29, 0
      %s32 = sadd.s32 %s31, 1
      %s33 = scalar_select %p30, %s31, %s32
      %p36 = pneg %p30
      %p37 = scmp.eq.s32.totalorder %s21, 1
      %p38 = por %p36, %p37
      %p39 = scmp.ne.s32.totalorder %s31, %s34
      %p40 = scmp.eq.s32.totalorder %s21, 0
      %p41 = por %p39, %p40
      %p42 = scmp.ne.s32.totalorder %s31, %s34
      %p43 = scmp.eq.s32.totalorder %s26, 1
      %p44 = por %p42, %p43
      %p45 = scmp.ne.s32.totalorder %s34, %s35
      %p46 = scmp.eq.s32.totalorder %s26, 0
      %p47 = por %p45, %p46
      %p48 = scmp.ne.s32.totalorder %s34, %s35
      %p49 = scmp.eq.s32.totalorder %s27, 1
      %p50 = por %p48, %p49
      %p52 = scmp.ne.s32.totalorder %s35, %s51
      %p53 = scmp.eq.s32.totalorder %s27, 0
      %p54 = por %p52, %p53
      %s56 = sadd.s32 %s55, 1
      %p59 = scmp.eq.s32.totalorder %s21, 1
      %p60 = scmp.ne.s32.totalorder %s55, %s57
      %p61 = scmp.eq.s32.totalorder %s21, 0
      %p62 = por %p60, %p61
      %p63 = scmp.ne.s32.totalorder %s55, %s57
      %p64 = scmp.eq.s32.totalorder %s26, 1
      %p65 = por %p63, %p64
      %p66 = scmp.ne.s32.totalorder %s57, %s58
      %p67 = scmp.eq.s32.totalorder %s26, 0
      %p68 = por %p66, %p67
      %p69 = scmp.ne.s32.totalorder %s57, %s58
      %p70 = scmp.eq.s32.totalorder %s27, 1
      %p71 = por %p69, %p70
      %p73 = scmp.ne.s32.totalorder %s58, %s72
      %p74 = scmp.eq.s32.totalorder %s27, 0
      %p75 = por %p73, %p74
      %s77 = sadd.s32 %s76, 1
      %p80 = scmp.eq.s32.totalorder %s21, 1
      %p81 = scmp.ne.s32.totalorder %s76, %s78
      %p82 = scmp.eq.s32.totalorder %s21, 0
      %p83 = por %p81, %p82
      %p84 = scmp.ne.s32.totalorder %s76, %s78
      %p85 = scmp.eq.s32.totalorder %s26, 1
      %p86 = por %p84, %p85
      %p87 = scmp.ne.s32.totalorder %s78, %s79
      %p88 = scmp.eq.s32.totalorder %s26, 0
      %p89 = por %p87, %p88
      %p90 = scmp.ne.s32.totalorder %s78, %s79
      %p91 = scmp.eq.s32.totalorder %s27, 1
      %p92 = por %p90, %p91
      %p94 = scmp.ne.s32.totalorder %s79, %s93
      %p95 = scmp.eq.s32.totalorder %s27, 0
      %p96 = por %p94, %p95
      %s98 = sadd.s32 %s97, 1
      %p101 = scmp.eq.s32.totalorder %s21, 1
      %p102 = scmp.ne.s32.totalorder %s97, %s99
      %p103 = scmp.eq.s32.totalorder %s21, 0
      %p104 = por %p102, %p103
      %p105 = scmp.ne.s32.totalorder %s97, %s99
      %p106 = scmp.eq.s32.totalorder %s26, 1
      %p107 = por %p105, %p106
      %p108 = scmp.ne.s32.totalorder %s99, %s100
      %p109 = scmp.eq.s32.totalorder %s26, 0
      %p110 = por %p108, %p109
      %p111 = scmp.ne.s32.totalorder %s99, %s100
      %p112 = scmp.eq.s32.totalorder %s27, 1
      %p113 = por %p111, %p112
      %p115 = scmp.ne.s32.totalorder %s100, %s114
      %p116 = scmp.eq.s32.totalorder %s27, 0
      %p117 = por %p115, %p116
      %s119 = sadd.s32 %s118, 1
      %p122 = scmp.eq.s32.totalorder %s21, 1
      %p123 = scmp.ne.s32.totalorder %s118, %s120
      %p124 = scmp.eq.s32.totalorder %s21, 0
      %p125 = por %p123, %p124
      %p126 = scmp.ne.s32.totalorder %s118, %s120
      %p127 = scmp.eq.s32.totalorder %s26, 1
      %p128 = por %p126, %p127
      %p129 = scmp.ne.s32.totalorder %s120, %s121
      %p130 = scmp.eq.s32.totalorder %s26, 0
      %p131 = por %p129, %p130
      %p132 = scmp.ne.s32.totalorder %s120, %s121
      %p133 = scmp.eq.s32.totalorder %s27, 1
      %p134 = por %p132, %p133
      %p136 = scmp.ne.s32.totalorder %s121, %s135
      %p137 = scmp.eq.s32.totalorder %s27, 0
      %p138 = por %p136, %p137
      %s140 = sadd.s32 %s139, 1
      %p143 = scmp.eq.s32.totalorder %s21, 1
      %p144 = scmp.ne.s32.totalorder %s139, %s141
      %p145 = scmp.eq.s32.totalorder %s21, 0
      %p146 = por %p144, %p145
      %p147 = scmp.ne.s32.totalorder %s139, %s141
      %p148 = scmp.eq.s32.totalorder %s26, 1
      %p149 = por %p147, %p148
      %p150 = scmp.ne.s32.totalorder %s141, %s142
      %p151 = scmp.eq.s32.totalorder %s26, 0
      %p152 = por %p150, %p151
      %p153 = scmp.ne.s32.totalorder %s141, %s142
      %p154 = scmp.eq.s32.totalorder %s27, 1
      %p155 = por %p153, %p154
      %p157 = scmp.ne.s32.totalorder %s142, %s156
      %p158 = scmp.eq.s32.totalorder %s27, 0
      %p159 = por %p157, %p158
      %s161 = sadd.s32 %s160, 1
      %p164 = scmp.eq.s32.totalorder %s21, 1
      %p165 = scmp.ne.s32.totalorder %s160, %s162
      %p166 = scmp.eq.s32.totalorder %s21, 0
      %p167 = por %p165, %p166
      %p168 = scmp.ne.s32.totalorder %s160, %s162
      %p169 = scmp.eq.s32.totalorder %s26, 1
      %p170 = por %p168, %p169
      %p171 = scmp.ne.s32.totalorder %s162, %s163
      %p172 = scmp.eq.s32.totalorder %s26, 0
      %p173 = por %p171, %p172
      %p174 = scmp.ne.s32.totalorder %s162, %s163
      %p175 = scmp.eq.s32.totalorder %s27, 1
      %p176 = por %p174, %p175
      %p178 = scmp.ne.s32.totalorder %s163, %s177
      %p179 = scmp.eq.s32.totalorder %s27, 0
      %p180 = por %p178, %p179
      %s181 = ssub.s32 %s21, %s28
      %p182 = scmp.eq.s32.totalorder %s181, 0
      %s184 = sadd.s32 %s183, 1
      %s185 = scalar_select %p182, %s183, %s184
      %p188 = pneg %p182
      %p189 = scmp.eq.s32.totalorder %s21, 1
      %p190 = por %p188, %p189
      %p191 = scmp.ne.s32.totalorder %s183, %s186
      %p192 = scmp.eq.s32.totalorder %s21, 0
      %p193 = por %p191, %p192
      %p194 = scmp.ne.s32.totalorder %s183, %s186
      %p195 = scmp.eq.s32.totalorder %s26, 1
      %p196 = por %p194, %p195
      %p197 = scmp.ne.s32.totalorder %s186, %s187
      %p198 = scmp.eq.s32.totalorder %s26, 0
      %p199 = por %p197, %p198
      %p200 = scmp.ne.s32.totalorder %s186, %s187
      %p201 = scmp.eq.s32.totalorder %s27, 1
      %p202 = por %p200, %p201
      %p204 = scmp.ne.s32.totalorder %s187, %s203
      %p205 = scmp.eq.s32.totalorder %s27, 0
      %p206 = por %p204, %p205
      %p207 = scmp.le.s32.totalorder 1, %s21
      %p208 = scmp.lt.s32.totalorder %s21, 3
      %p209 = pnand %p207, %p208
      %p210 = pneg %p209
      // Predicated region
      $region9: #{tpu_custom_call.1} parent=5 // pred_check
        _
      $region10: #{tpu_custom_call.1} parent=5 // pred_check_branch
        %212 = sbr.rel (%p209) target = $region12
      $region11: #{tpu_custom_call.1} parent=5 // pred_region
        %s213 = ssub.s32 %s21, 1
        // Predicated region
        $region13: #{tpu_custom_call.1} parent=11 // pred_check
          %p214 = pneg %p68
        $region14: #{tpu_custom_call.1} parent=11 // pred_check_branch
          %216 = sbr.rel (%p214) target = $region16
        $region15: #{tpu_custom_call.1} parent=11 // pred_region
          %218 = vsyncadd [#allocation6], 0
          %s219 = sshll.u32 %s1, 4
          %s220 = int_to_ptr.hbm [resolvable:$true] %s219
          %s221 = sshll.u32 [#allocation5], 4
          %s222 = int_to_ptr.vmem [resolvable:$true] %s221
          %227 = dma.hbm_to_vmem [thread:$0]  %s220, 6144, %s222, [#allocation6], 64, 64, 4
        $region16: #{tpu_custom_call.1} parent=11 // pred_fallthru
          _
        // Predicated region
        $region17: #{tpu_custom_call.1} parent=11 // pred_check
          %p228 = pneg %p89
        $region18: #{tpu_custom_call.1} parent=11 // pred_check_branch
          %230 = sbr.rel (%p228) target = $region20
        $region19: #{tpu_custom_call.1} parent=11 // pred_region
          %232 = vsyncadd [#allocation6], 0
          %s234 = sshll.u32 %s2, 4
          %s235 = int_to_ptr.hbm [resolvable:$true] %s234
          %s236 = sshll.u32 [#allocation7], 4
          %s237 = int_to_ptr.vmem [resolvable:$true] %s236
          %239 = dma.hbm_to_vmem [thread:$0]  %s235, 16, %s237, [#allocation6]
        $region20: #{tpu_custom_call.1} parent=11 // pred_fallthru
          _
        // Predicated region
        $region21: #{tpu_custom_call.1} parent=11 // pred_check
          %p240 = pneg %p110
        $region22: #{tpu_custom_call.1} parent=11 // pred_check_branch
          %242 = sbr.rel (%p240) target = $region24
        $region23: #{tpu_custom_call.1} parent=11 // pred_region
          %244 = vsyncadd [#allocation9], 0
          %s245 = sshll.u32 %s3, 4
          %s246 = int_to_ptr.hbm [resolvable:$true] %s245
          %s247 = sshll.u32 [#allocation8], 4
          %s248 = int_to_ptr.vmem [resolvable:$true] %s247
          %253 = dma.hbm_to_vmem [thread:$0]  %s246, 3072, %s248, [#allocation9], 64, 64, 4
        $region24: #{tpu_custom_call.1} parent=11 // pred_fallthru
          _
        // Predicated region
        $region25: #{tpu_custom_call.1} parent=11 // pred_check
          %p254 = pneg %p131
        $region26: #{tpu_custom_call.1} parent=11 // pred_check_branch
          %256 = sbr.rel (%p254) target = $region28
        $region27: #{tpu_custom_call.1} parent=11 // pred_region
          _
        $region28: #{tpu_custom_call.1} parent=11 // pred_fallthru
          _
        // Predicated region
        $region29: #{tpu_custom_call.1} parent=11 // pred_check
          %p257 = pneg %p152
        $region30: #{tpu_custom_call.1} parent=11 // pred_check_branch
          %259 = sbr.rel (%p257) target = $region32
        $region31: #{tpu_custom_call.1} parent=11 // pred_region
          %261 = vsyncadd [#allocation9], 0
          %s262 = sshll.u32 %s5, 4
          %s263 = int_to_ptr.hbm [resolvable:$true] %s262
          %s264 = sshll.u32 [#allocation10], 4
          %s265 = int_to_ptr.vmem [resolvable:$true] %s264
          %270 = dma.hbm_to_vmem [thread:$0]  %s263, 1024, %s265, [#allocation9], 64, 64, 4
        $region32: #{tpu_custom_call.1} parent=11 // pred_fallthru
          _
        // Predicated region
        $region33: #{tpu_custom_call.1} parent=11 // pred_check
          %p271 = pneg %p173
        $region34: #{tpu_custom_call.1} parent=11 // pred_check_branch
          %273 = sbr.rel (%p271) target = $region36
        $region35: #{tpu_custom_call.1} parent=11 // pred_region
          _
        $region36: #{tpu_custom_call.1} parent=11 // pred_fallthru
          _
      $region12: #{tpu_custom_call.1} parent=5 // pred_fallthru
        _
      %p274 = scmp.lt.s32.totalorder %s21, 2
      // Predicated region
      $region37: #{tpu_custom_call.1} parent=5 // pred_check
        %p275 = pneg %p274
      $region38: #{tpu_custom_call.1} parent=5 // pred_check_branch
        %277 = sbr.rel (%p275) target = $region40
      $region39: #{tpu_custom_call.1} parent=5 // pred_region
        // Predicated region
        $region41: #{tpu_custom_call.1} parent=39 // pred_check
          %p278 = pneg %p41
        $region42: #{tpu_custom_call.1} parent=39 // pred_check_branch
          %280 = sbr.rel (%p278) target = $region44
        $region43: #{tpu_custom_call.1} parent=39 // pred_region
          %s281 = sand.u32 %s31, 1
          %s282 = scalar_lea.sflag [#allocation3], %s281
          %s283 = sand.u32 %s31, 1
          %s284 = smul.addr %s283, 768
          %s285 = scalar_lea.vmem [#allocation2], %s284
          %s286 = smul.u32 16, %s21
          %288 = vsyncadd %s282, 0
          %s289 = smul.addr %s286, 6
          %s290 = smul.addr %s289, 8
          %s291 = scalar_lea.hbm %s0, %s290
          %s292 = sshll.u32 %s291, 4
          %s293 = int_to_ptr.hbm [resolvable:$true] %s292
          %s294 = sshll.u32 %s285, 4
          %s295 = int_to_ptr.vmem [resolvable:$true] %s294
          %300 = dma.hbm_to_vmem [thread:$0]  %s293, 12288, %s295, %s282, 768, 768, 48
        $region44: #{tpu_custom_call.1} parent=39 // pred_fallthru
          _
      $region40: #{tpu_custom_call.1} parent=5 // pred_fallthru
        _
      %p301 = scmp.le.s32.totalorder 1, %s21
      %p302 = scmp.lt.s32.totalorder %s21, 3
      %p303 = pnand %p301, %p302
      %p304 = pneg %p303
      // Predicated region
      $region45: #{tpu_custom_call.1} parent=5 // pred_check
        _
      $region46: #{tpu_custom_call.1} parent=5 // pred_check_branch
        %306 = sbr.rel (%p303) target = $region48
      $region47: #{tpu_custom_call.1} parent=5 // pred_region
        %s307 = ssub.s32 %s21, 1
        %s308 = sand.u32 %s34, 1
        %s309 = scalar_lea.sflag [#allocation3], %s308
        %s310 = sand.u32 %s34, 1
        %s311 = smul.addr %s310, 768
        %s312 = scalar_lea.vmem [#allocation2], %s311
        // Predicated region
        $region49: #{tpu_custom_call.1} parent=47 // pred_check
          %p313 = pneg %p47
        $region50: #{tpu_custom_call.1} parent=47 // pred_check_branch
          %315 = sbr.rel (%p313) target = $region52
        $region51: #{tpu_custom_call.1} parent=47 // pred_region
          %317 = dma.done %s309, 12288
        $region52: #{tpu_custom_call.1} parent=47 // pred_fallthru
          _
        // Predicated region
        $region53: #{tpu_custom_call.1} parent=47 // pred_check
          %p318 = pneg %p68
        $region54: #{tpu_custom_call.1} parent=47 // pred_check_branch
          %320 = sbr.rel (%p318) target = $region56
        $region55: #{tpu_custom_call.1} parent=47 // pred_region
          %322 = dma.done [#allocation6], 6144
        $region56: #{tpu_custom_call.1} parent=47 // pred_fallthru
          _
        // Predicated region
        $region57: #{tpu_custom_call.1} parent=47 // pred_check
          %p323 = pneg %p89
        $region58: #{tpu_custom_call.1} parent=47 // pred_check_branch
          %325 = sbr.rel (%p323) target = $region60
        $region59: #{tpu_custom_call.1} parent=47 // pred_region
          %327 = dma.done [#allocation6], 16
        $region60: #{tpu_custom_call.1} parent=47 // pred_fallthru
          _
        // Predicated region
        $region61: #{tpu_custom_call.1} parent=47 // pred_check
          %p328 = pneg %p110
        $region62: #{tpu_custom_call.1} parent=47 // pred_check_branch
          %330 = sbr.rel (%p328) target = $region64
        $region63: #{tpu_custom_call.1} parent=47 // pred_region
          %332 = dma.done [#allocation9], 3072
        $region64: #{tpu_custom_call.1} parent=47 // pred_fallthru
          _
        // Predicated region
        $region65: #{tpu_custom_call.1} parent=47 // pred_check
          %p333 = pneg %p152
        $region66: #{tpu_custom_call.1} parent=47 // pred_check_branch
          %335 = sbr.rel (%p333) target = $region68
        $region67: #{tpu_custom_call.1} parent=47 // pred_region
          %337 = dma.done [#allocation9], 1024
        $region68: #{tpu_custom_call.1} parent=47 // pred_fallthru
          _
        %s338 = sand.u32 %s34, 1
        %s339 = scalar_lea.sflag [#allocation3], %s338
        %s340 = sand.u32 %s34, 1
        %s341 = smul.addr %s340, 768
        %s342 = scalar_lea.vmem [#allocation2], %s341
        %p343 = pneg %p47
        %p344 = pneg %p44
        %p345 = pneg %p68
        %p346 = pneg %p65
        %p347 = pneg %p89
        %p348 = pneg %p86
        %p349 = pneg %p110
        %p350 = pneg %p107
        %p351 = pneg %p131
        %p352 = pneg %p128
        %p353 = pneg %p152
        %p354 = pneg %p149
        %p355 = pneg %p173
        %p356 = pneg %p170
        %p357 = pneg %p199
        %p358 = pneg %p196
        %s359 = sand.u32 %s186, 1
        %s360 = scalar_lea.sflag [#allocation4], %s359
        %s361 = sand.u32 %s186, 1
        %s362 = smul.addr %s361, 128
        %s363 = scalar_lea.vmem [#allocation11], %s362
        %s364 = smul.u32 16, %s26
        %s365 = smul.u32 16, %s26
        %v366 = vld [vmem:[%s312] sm:$0xff]
        %v367 = vld [vmem:[%s312 + $0x8] sm:$0xff]
        %v368 = vld [vmem:[%s312 + $0x10] sm:$0xff]
        %v369 = vld [vmem:[%s312 + $0x18] sm:$0xff]
        %v370 = vld [vmem:[%s312 + $0x20] sm:$0xff]
        %v371 = vld [vmem:[%s312 + $0x28] sm:$0xff]
        %v372 = vld [vmem:[%s312 + $0x30] sm:$0xff]
        %v373 = vld [vmem:[%s312 + $0x38] sm:$0xff]
        %v374 = vld [vmem:[%s312 + $0x40] sm:$0xff]
        %v375 = vld [vmem:[%s312 + $0x48] sm:$0xff]
        %v376 = vld [vmem:[%s312 + $0x50] sm:$0xff]
        %v377 = vld [vmem:[%s312 + $0x58] sm:$0xff]
        %v378 = vld [vmem:[%s312 + $0x60] sm:$0xff]
        %v379 = vld [vmem:[%s312 + $0x68] sm:$0xff]
        %v380 = vld [vmem:[%s312 + $0x70] sm:$0xff]
        %v381 = vld [vmem:[%s312 + $0x78] sm:$0xff]
        %v382 = vld [vmem:[%s312 + $0x80] sm:$0xff]
        %v383 = vld [vmem:[%s312 + $0x88] sm:$0xff]
        %v384 = vld [vmem:[%s312 + $0x90] sm:$0xff]
        %v385 = vld [vmem:[%s312 + $0x98] sm:$0xff]
        %v386 = vld [vmem:[%s312 + $0xa0] sm:$0xff]
        %v387 = vld [vmem:[%s312 + $0xa8] sm:$0xff]
        %v388 = vld [vmem:[%s312 + $0xb0] sm:$0xff]
        %v389 = vld [vmem:[%s312 + $0xb8] sm:$0xff]
        %v390 = vld [vmem:[%s312 + $0xc0] sm:$0xff]
        %v391 = vld [vmem:[%s312 + $0xc8] sm:$0xff]
        %v392 = vld [vmem:[%s312 + $0xd0] sm:$0xff]
        %v393 = vld [vmem:[%s312 + $0xd8] sm:$0xff]
        %v394 = vld [vmem:[%s312 + $0xe0] sm:$0xff]
        %v395 = vld [vmem:[%s312 + $0xe8] sm:$0xff]
        %v396 = vld [vmem:[%s312 + $0xf0] sm:$0xff]
        %v397 = vld [vmem:[%s312 + $0xf8] sm:$0xff]
        %v398 = vld [vmem:[%s312 + $0x100] sm:$0xff]
        %v399 = vld [vmem:[%s312 + $0x108] sm:$0xff]
        %v400 = vld [vmem:[%s312 + $0x110] sm:$0xff]
        %v401 = vld [vmem:[%s312 + $0x118] sm:$0xff]
        %v402 = vld [vmem:[%s312 + $0x120] sm:$0xff]
        %v403 = vld [vmem:[%s312 + $0x128] sm:$0xff]
        %v404 = vld [vmem:[%s312 + $0x130] sm:$0xff]
        %v405 = vld [vmem:[%s312 + $0x138] sm:$0xff]
        %v406 = vld [vmem:[%s312 + $0x140] sm:$0xff]
        %v407 = vld [vmem:[%s312 + $0x148] sm:$0xff]
        %v408 = vld [vmem:[%s312 + $0x150] sm:$0xff]
        %v409 = vld [vmem:[%s312 + $0x158] sm:$0xff]
        %v410 = vld [vmem:[%s312 + $0x160] sm:$0xff]
        %v411 = vld [vmem:[%s312 + $0x168] sm:$0xff]
        %v412 = vld [vmem:[%s312 + $0x170] sm:$0xff]
        %v413 = vld [vmem:[%s312 + $0x178] sm:$0xff]
        %v414 = vpack.c.bf16 %v372, %v366
        %v415 = vpack.c.bf16 %v373, %v367
        %v416 = vpack.c.bf16 %v374, %v368
        %v417 = vpack.c.bf16 %v375, %v369
        %v418 = vpack.c.bf16 %v376, %v370
        %v419 = vpack.c.bf16 %v377, %v371
        %v420 = vpack.c.bf16 %v384, %v378
        %v421 = vpack.c.bf16 %v385, %v379
        %v422 = vpack.c.bf16 %v386, %v380
        %v423 = vpack.c.bf16 %v387, %v381
        %v424 = vpack.c.bf16 %v388, %v382
        %v425 = vpack.c.bf16 %v389, %v383
        %v426 = vpack.c.bf16 %v396, %v390
        %v427 = vpack.c.bf16 %v397, %v391
        %v428 = vpack.c.bf16 %v398, %v392
        %v429 = vpack.c.bf16 %v399, %v393
        %v430 = vpack.c.bf16 %v400, %v394
        %v431 = vpack.c.bf16 %v401, %v395
        %v432 = vpack.c.bf16 %v408, %v402
        %v433 = vpack.c.bf16 %v409, %v403
        %v434 = vpack.c.bf16 %v410, %v404
        %v435 = vpack.c.bf16 %v411, %v405
        %v436 = vpack.c.bf16 %v412, %v406
        %v437 = vpack.c.bf16 %v413, %v407
        %v438 = vld [vmem:[#allocation5] sm:$0xf]
        %v439 = vld [vmem:[#allocation5 + $0x4] sm:$0xf]
        %v440 = vld [vmem:[#allocation5 + $0x8] sm:$0xf]
        %v441 = vld [vmem:[#allocation5 + $0xc] sm:$0xf]
        %v442 = vld [vmem:[#allocation5 + $0x10] sm:$0xf]
        %v443 = vld [vmem:[#allocation5 + $0x14] sm:$0xf]
        %v444 = vld [vmem:[#allocation5 + $0x18] sm:$0xf]
        %v445 = vld [vmem:[#allocation5 + $0x1c] sm:$0xf]
        %v446 = vld [vmem:[#allocation5 + $0x20] sm:$0xf]
        %v447 = vld [vmem:[#allocation5 + $0x24] sm:$0xf]
        %v448 = vld [vmem:[#allocation5 + $0x28] sm:$0xf]
        %v449 = vld [vmem:[#allocation5 + $0x2c] sm:$0xf]
        %v450 = vld [vmem:[#allocation5 + $0x30] sm:$0xf]
        %v451 = vld [vmem:[#allocation5 + $0x34] sm:$0xf]
        %v452 = vld [vmem:[#allocation5 + $0x38] sm:$0xf]
        %v453 = vld [vmem:[#allocation5 + $0x3c] sm:$0xf]
        %v454 = vld [vmem:[#allocation5 + $0x40] sm:$0xf]
        %v455 = vld [vmem:[#allocation5 + $0x44] sm:$0xf]
        %v456 = vld [vmem:[#allocation5 + $0x48] sm:$0xf]
        %v457 = vld [vmem:[#allocation5 + $0x4c] sm:$0xf]
        %v458 = vld [vmem:[#allocation5 + $0x50] sm:$0xf]
        %v459 = vld [vmem:[#allocation5 + $0x54] sm:$0xf]
        %v460 = vld [vmem:[#allocation5 + $0x58] sm:$0xf]
        %v461 = vld [vmem:[#allocation5 + $0x5c] sm:$0xf]
        %v462 = vld [vmem:[#allocation5 + $0x60] sm:$0xf]
        %v463 = vld [vmem:[#allocation5 + $0x64] sm:$0xf]
        %v464 = vld [vmem:[#allocation5 + $0x68] sm:$0xf]
        %v465 = vld [vmem:[#allocation5 + $0x6c] sm:$0xf]
        %v466 = vld [vmem:[#allocation5 + $0x70] sm:$0xf]
        %v467 = vld [vmem:[#allocation5 + $0x74] sm:$0xf]
        %v468 = vld [vmem:[#allocation5 + $0x78] sm:$0xf]
        %v469 = vld [vmem:[#allocation5 + $0x7c] sm:$0xf]
        %v470 = vld [vmem:[#allocation5 + $0x80] sm:$0xf]
        %v471 = vld [vmem:[#allocation5 + $0x84] sm:$0xf]
        %v472 = vld [vmem:[#allocation5 + $0x88] sm:$0xf]
        %v473 = vld [vmem:[#allocation5 + $0x8c] sm:$0xf]
        %v474 = vld [vmem:[#allocation5 + $0x90] sm:$0xf]
        %v475 = vld [vmem:[#allocation5 + $0x94] sm:$0xf]
        %v476 = vld [vmem:[#allocation5 + $0x98] sm:$0xf]
        %v477 = vld [vmem:[#allocation5 + $0x9c] sm:$0xf]
        %v478 = vld [vmem:[#allocation5 + $0xa0] sm:$0xf]
        %v479 = vld [vmem:[#allocation5 + $0xa4] sm:$0xf]
        %v480 = vld [vmem:[#allocation5 + $0xa8] sm:$0xf]
        %v481 = vld [vmem:[#allocation5 + $0xac] sm:$0xf]
        %v482 = vld [vmem:[#allocation5 + $0xb0] sm:$0xf]
        %v483 = vld [vmem:[#allocation5 + $0xb4] sm:$0xf]
        %v484 = vld [vmem:[#allocation5 + $0xb8] sm:$0xf]
        %v485 = vld [vmem:[#allocation5 + $0xbc] sm:$0xf]
        %v486 = vld [vmem:[#allocation5 + $0xc0] sm:$0xf]
        %v487 = vld [vmem:[#allocation5 + $0xc4] sm:$0xf]
        %v488 = vld [vmem:[#allocation5 + $0xc8] sm:$0xf]
        %v489 = vld [vmem:[#allocation5 + $0xcc] sm:$0xf]
        %v490 = vld [vmem:[#allocation5 + $0xd0] sm:$0xf]
        %v491 = vld [vmem:[#allocation5 + $0xd4] sm:$0xf]
        %v492 = vld [vmem:[#allocation5 + $0xd8] sm:$0xf]
        %v493 = vld [vmem:[#allocation5 + $0xdc] sm:$0xf]
        %v494 = vld [vmem:[#allocation5 + $0xe0] sm:$0xf]
        %v495 = vld [vmem:[#allocation5 + $0xe4] sm:$0xf]
        %v496 = vld [vmem:[#allocation5 + $0xe8] sm:$0xf]
        %v497 = vld [vmem:[#allocation5 + $0xec] sm:$0xf]
        %v498 = vld [vmem:[#allocation5 + $0xf0] sm:$0xf]
        %v499 = vld [vmem:[#allocation5 + $0xf4] sm:$0xf]
        %v500 = vld [vmem:[#allocation5 + $0xf8] sm:$0xf]
        %v501 = vld [vmem:[#allocation5 + $0xfc] sm:$0xf]
        %v502 = vld [vmem:[#allocation5 + $0x100] sm:$0xf]
        %v503 = vld [vmem:[#allocation5 + $0x104] sm:$0xf]
        %v504 = vld [vmem:[#allocation5 + $0x108] sm:$0xf]
        %v505 = vld [vmem:[#allocation5 + $0x10c] sm:$0xf]
        %v506 = vld [vmem:[#allocation5 + $0x110] sm:$0xf]
        %v507 = vld [vmem:[#allocation5 + $0x114] sm:$0xf]
        %v508 = vld [vmem:[#allocation5 + $0x118] sm:$0xf]
        %v509 = vld [vmem:[#allocation5 + $0x11c] sm:$0xf]
        %v510 = vld [vmem:[#allocation5 + $0x120] sm:$0xf]
        %v511 = vld [vmem:[#allocation5 + $0x124] sm:$0xf]
        %v512 = vld [vmem:[#allocation5 + $0x128] sm:$0xf]
        %v513 = vld [vmem:[#allocation5 + $0x12c] sm:$0xf]
        %v514 = vld [vmem:[#allocation5 + $0x130] sm:$0xf]
        %v515 = vld [vmem:[#allocation5 + $0x134] sm:$0xf]
        %v516 = vld [vmem:[#allocation5 + $0x138] sm:$0xf]
        %v517 = vld [vmem:[#allocation5 + $0x13c] sm:$0xf]
        %v518 = vld [vmem:[#allocation5 + $0x140] sm:$0xf]
        %v519 = vld [vmem:[#allocation5 + $0x144] sm:$0xf]
        %v520 = vld [vmem:[#allocation5 + $0x148] sm:$0xf]
        %v521 = vld [vmem:[#allocation5 + $0x14c] sm:$0xf]
        %v522 = vld [vmem:[#allocation5 + $0x150] sm:$0xf]
        %v523 = vld [vmem:[#allocation5 + $0x154] sm:$0xf]
        %v524 = vld [vmem:[#allocation5 + $0x158] sm:$0xf]
        %v525 = vld [vmem:[#allocation5 + $0x15c] sm:$0xf]
        %v526 = vld [vmem:[#allocation5 + $0x160] sm:$0xf]
        %v527 = vld [vmem:[#allocation5 + $0x164] sm:$0xf]
        %v528 = vld [vmem:[#allocation5 + $0x168] sm:$0xf]
        %v529 = vld [vmem:[#allocation5 + $0x16c] sm:$0xf]
        %v530 = vld [vmem:[#allocation5 + $0x170] sm:$0xf]
        %v531 = vld [vmem:[#allocation5 + $0x174] sm:$0xf]
        %v532 = vld [vmem:[#allocation5 + $0x178] sm:$0xf]
        %v533 = vld [vmem:[#allocation5 + $0x17c] sm:$0xf]
        %v534 = vld [vmem:[#allocation7] sm:$0x1]
        %v536 = vperm.slane %v534, 0
        %v634 = vunpack.c.l.b16 %v438
        %v635 = vunpack.c.l.b16 %v439
        %v636 = vunpack.c.l.b16 %v440
        %v637 = vunpack.c.l.b16 %v441
        %v638 = vunpack.c.l.b16 %v442
        %v639 = vunpack.c.l.b16 %v443
        %v640 = vunpack.c.l.b16 %v444
        %v641 = vunpack.c.l.b16 %v445
        %v642 = vunpack.c.l.b16 %v446
        %v643 = vunpack.c.l.b16 %v447
        %v644 = vunpack.c.l.b16 %v448
        %v645 = vunpack.c.l.b16 %v449
        %v646 = vunpack.c.l.b16 %v450
        %v647 = vunpack.c.l.b16 %v451
        %v648 = vunpack.c.l.b16 %v452
        %v649 = vunpack.c.l.b16 %v453
        %v650 = vunpack.c.l.b16 %v454
        %v651 = vunpack.c.l.b16 %v455
        %v652 = vunpack.c.l.b16 %v456
        %v653 = vunpack.c.l.b16 %v457
        %v654 = vunpack.c.l.b16 %v458
        %v655 = vunpack.c.l.b16 %v459
        %v656 = vunpack.c.l.b16 %v460
        %v657 = vunpack.c.l.b16 %v461
        %v658 = vunpack.c.l.b16 %v462
        %v659 = vunpack.c.l.b16 %v463
        %v660 = vunpack.c.l.b16 %v464
        %v661 = vunpack.c.l.b16 %v465
        %v662 = vunpack.c.l.b16 %v466
        %v663 = vunpack.c.l.b16 %v467
        %v664 = vunpack.c.l.b16 %v468
        %v665 = vunpack.c.l.b16 %v469
        %v666 = vunpack.c.l.b16 %v470
        %v667 = vunpack.c.l.b16 %v471
        %v668 = vunpack.c.l.b16 %v472
        %v669 = vunpack.c.l.b16 %v473
        %v670 = vunpack.c.l.b16 %v474
        %v671 = vunpack.c.l.b16 %v475
        %v672 = vunpack.c.l.b16 %v476
        %v673 = vunpack.c.l.b16 %v477
        %v674 = vunpack.c.l.b16 %v478
        %v675 = vunpack.c.l.b16 %v479
        %v676 = vunpack.c.l.b16 %v480
        %v677 = vunpack.c.l.b16 %v481
        %v678 = vunpack.c.l.b16 %v482
        %v679 = vunpack.c.l.b16 %v483
        %v680 = vunpack.c.l.b16 %v484
        %v681 = vunpack.c.l.b16 %v485
        %v682 = vunpack.c.l.b16 %v486
        %v683 = vunpack.c.l.b16 %v487
        %v684 = vunpack.c.l.b16 %v488
        %v685 = vunpack.c.l.b16 %v489
        %v686 = vunpack.c.l.b16 %v490
        %v687 = vunpack.c.l.b16 %v491
        %v688 = vunpack.c.l.b16 %v492
        %v689 = vunpack.c.l.b16 %v493
        %v690 = vunpack.c.l.b16 %v494
        %v691 = vunpack.c.l.b16 %v495
        %v692 = vunpack.c.l.b16 %v496
        %v693 = vunpack.c.l.b16 %v497
        %v694 = vunpack.c.l.b16 %v498
        %v695 = vunpack.c.l.b16 %v499
        %v696 = vunpack.c.l.b16 %v500
        %v697 = vunpack.c.l.b16 %v501
        %v698 = vunpack.c.l.b16 %v502
        %v699 = vunpack.c.l.b16 %v503
        %v700 = vunpack.c.l.b16 %v504
        %v701 = vunpack.c.l.b16 %v505
        %v702 = vunpack.c.l.b16 %v506
        %v703 = vunpack.c.l.b16 %v507
        %v704 = vunpack.c.l.b16 %v508
        %v705 = vunpack.c.l.b16 %v509
        %v706 = vunpack.c.l.b16 %v510
        %v707 = vunpack.c.l.b16 %v511
        %v708 = vunpack.c.l.b16 %v512
        %v709 = vunpack.c.l.b16 %v513
        %v710 = vunpack.c.l.b16 %v514
        %v711 = vunpack.c.l.b16 %v515
        %v712 = vunpack.c.l.b16 %v516
        %v713 = vunpack.c.l.b16 %v517
        %v714 = vunpack.c.l.b16 %v518
        %v715 = vunpack.c.l.b16 %v519
        %v716 = vunpack.c.l.b16 %v520
        %v717 = vunpack.c.l.b16 %v521
        %v718 = vunpack.c.l.b16 %v522
        %v719 = vunpack.c.l.b16 %v523
        %v720 = vunpack.c.l.b16 %v524
        %v721 = vunpack.c.l.b16 %v525
        %v722 = vunpack.c.l.b16 %v526
        %v723 = vunpack.c.l.b16 %v527
        %v724 = vunpack.c.l.b16 %v528
        %v725 = vunpack.c.l.b16 %v529
        %v726 = vunpack.c.l.b16 %v530
        %v727 = vunpack.c.l.b16 %v531
        %v728 = vunpack.c.l.b16 %v532
        %v729 = vunpack.c.l.b16 %v533
        %v730 = vpack.c.b16 %v635, %v634
        %v731 = vpack.c.b16 %v637, %v636
        %v732 = vpack.c.b16 %v639, %v638
        %v733 = vpack.c.b16 %v641, %v640
        %v734 = vpack.c.b16 %v643, %v642
        %v735 = vpack.c.b16 %v645, %v644
        %v736 = vpack.c.b16 %v647, %v646
        %v737 = vpack.c.b16 %v649, %v648
        %v738 = vpack.c.b16 %v651, %v650
        %v739 = vpack.c.b16 %v653, %v652
        %v740 = vpack.c.b16 %v655, %v654
        %v741 = vpack.c.b16 %v657, %v656
        %v742 = vpack.c.b16 %v659, %v658
        %v743 = vpack.c.b16 %v661, %v660
        %v744 = vpack.c.b16 %v663, %v662
        %v745 = vpack.c.b16 %v665, %v664
        %v746 = vpack.c.b16 %v667, %v666
        %v747 = vpack.c.b16 %v669, %v668
        %v748 = vpack.c.b16 %v671, %v670
        %v749 = vpack.c.b16 %v673, %v672
        %v750 = vpack.c.b16 %v675, %v674
        %v751 = vpack.c.b16 %v677, %v676
        %v752 = vpack.c.b16 %v679, %v678
        %v753 = vpack.c.b16 %v681, %v680
        %v754 = vpack.c.b16 %v683, %v682
        %v755 = vpack.c.b16 %v685, %v684
        %v756 = vpack.c.b16 %v687, %v686
        %v757 = vpack.c.b16 %v689, %v688
        %v758 = vpack.c.b16 %v691, %v690
        %v759 = vpack.c.b16 %v693, %v692
        %v760 = vpack.c.b16 %v695, %v694
        %v761 = vpack.c.b16 %v697, %v696
        %v762 = vpack.c.b16 %v699, %v698
        %v763 = vpack.c.b16 %v701, %v700
        %v764 = vpack.c.b16 %v703, %v702
        %v765 = vpack.c.b16 %v705, %v704
        %v766 = vpack.c.b16 %v707, %v706
        %v767 = vpack.c.b16 %v709, %v708
        %v768 = vpack.c.b16 %v711, %v710
        %v769 = vpack.c.b16 %v713, %v712
        %v770 = vpack.c.b16 %v715, %v714
        %v771 = vpack.c.b16 %v717, %v716
        %v772 = vpack.c.b16 %v719, %v718
        %v773 = vpack.c.b16 %v721, %v720
        %v774 = vpack.c.b16 %v723, %v722
        %v775 = vpack.c.b16 %v725, %v724
        %v776 = vpack.c.b16 %v727, %v726
        %v777 = vpack.c.b16 %v729, %v728
        %826 = vmatpush.bf16.msra.mxu0 %v737
        %827 = vmatpush.bf16.msra.mxu0 %v736
        %828 = vmatpush.bf16.msra.mxu0 %v735
        %829 = vmatpush.bf16.msra.mxu0 %v734
        %830 = vmatpush.bf16.msra.mxu0 %v733
        %831 = vmatpush.bf16.msra.mxu0 %v732
        %832 = vmatpush.bf16.msra.mxu0 %v731
        %833 = vmatpush.bf16.msra.mxu0 %v730
        %834 = vmatmul.bf16.gmra.mxu0 %v414
        %v835 = vpop.f32.mrf.mxu0
        %v836 = vadd.f32 %v536, %v835
        %v837 = vpop.f32.mrf.mxu0
        %v838 = vadd.f32 %v536, %v837
        %839 = vmatmul.bf16.gmra.mxu0 %v420
        %v840 = vpop.f32.mrf.mxu0
        %v841 = vadd.f32 %v536, %v840
        %v842 = vpop.f32.mrf.mxu0
        %v843 = vadd.f32 %v536, %v842
        %844 = vmatmul.bf16.gmra.mxu0 %v426
        %v845 = vpop.f32.mrf.mxu0
        %v846 = vadd.f32 %v536, %v845
        %v847 = vpop.f32.mrf.mxu0
        %v848 = vadd.f32 %v536, %v847
        %849 = vmatmul.bf16.gmra.mxu0 %v432
        %v850 = vpop.f32.mrf.mxu0
        %v851 = vadd.f32 %v536, %v850
        %v852 = vpop.f32.mrf.mxu0
        %v853 = vadd.f32 %v536, %v852
        %854 = vdwg.mxu0
        %855 = vmatpush.bf16.msra.mxu0 %v745
        %856 = vmatpush.bf16.msra.mxu0 %v744
        %857 = vmatpush.bf16.msra.mxu0 %v743
        %858 = vmatpush.bf16.msra.mxu0 %v742
        %859 = vmatpush.bf16.msra.mxu0 %v741
        %860 = vmatpush.bf16.msra.mxu0 %v740
        %861 = vmatpush.bf16.msra.mxu0 %v739
        %862 = vmatpush.bf16.msra.mxu0 %v738
        %863 = vmatmul.bf16.gmra.mxu0 %v415
        %v864 = vpop.f32.mrf.mxu0
        %v865 = vadd.f32 %v836, %v864
        %v866 = vpop.f32.mrf.mxu0
        %v867 = vadd.f32 %v838, %v866
        %868 = vmatmul.bf16.gmra.mxu0 %v421
        %v869 = vpop.f32.mrf.mxu0
        %v870 = vadd.f32 %v841, %v869
        %v871 = vpop.f32.mrf.mxu0
        %v872 = vadd.f32 %v843, %v871
        %873 = vmatmul.bf16.gmra.mxu0 %v427
        %v874 = vpop.f32.mrf.mxu0
        %v875 = vadd.f32 %v846, %v874
        %v876 = vpop.f32.mrf.mxu0
        %v877 = vadd.f32 %v848, %v876
        %878 = vmatmul.bf16.gmra.mxu0 %v433
        %v879 = vpop.f32.mrf.mxu0
        %v880 = vadd.f32 %v851, %v879
        %v881 = vpop.f32.mrf.mxu0
        %v882 = vadd.f32 %v853, %v881
        %883 = vdwg.mxu0
        %884 = vmatpush.bf16.msra.mxu0 %v753
        %885 = vmatpush.bf16.msra.mxu0 %v752
        %886 = vmatpush.bf16.msra.mxu0 %v751
        %887 = vmatpush.bf16.msra.mxu0 %v750
        %888 = vmatpush.bf16.msra.mxu0 %v749
        %889 = vmatpush.bf16.msra.mxu0 %v748
        %890 = vmatpush.bf16.msra.mxu0 %v747
        %891 = vmatpush.bf16.msra.mxu0 %v746
        %892 = vmatmul.bf16.gmra.mxu0 %v416
        %v893 = vpop.f32.mrf.mxu0
        %v894 = vadd.f32 %v865, %v893
        %v895 = vpop.f32.mrf.mxu0
        %v896 = vadd.f32 %v867, %v895
        %897 = vmatmul.bf16.gmra.mxu0 %v422
        %v898 = vpop.f32.mrf.mxu0
        %v899 = vadd.f32 %v870, %v898
        %v900 = vpop.f32.mrf.mxu0
        %v901 = vadd.f32 %v872, %v900
        %902 = vmatmul.bf16.gmra.mxu0 %v428
        %v903 = vpop.f32.mrf.mxu0
        %v904 = vadd.f32 %v875, %v903
        %v905 = vpop.f32.mrf.mxu0
        %v906 = vadd.f32 %v877, %v905
        %907 = vmatmul.bf16.gmra.mxu0 %v434
        %v908 = vpop.f32.mrf.mxu0
        %v909 = vadd.f32 %v880, %v908
        %v910 = vpop.f32.mrf.mxu0
        %v911 = vadd.f32 %v882, %v910
        %912 = vdwg.mxu0
        %913 = vmatpush.bf16.msra.mxu0 %v761
        %914 = vmatpush.bf16.msra.mxu0 %v760
        %915 = vmatpush.bf16.msra.mxu0 %v759
        %916 = vmatpush.bf16.msra.mxu0 %v758
        %917 = vmatpush.bf16.msra.mxu0 %v757
        %918 = vmatpush.bf16.msra.mxu0 %v756
        %919 = vmatpush.bf16.msra.mxu0 %v755
        %920 = vmatpush.bf16.msra.mxu0 %v754
        %921 = vmatmul.bf16.gmra.mxu0 %v417
        %v922 = vpop.f32.mrf.mxu0
        %v923 = vadd.f32 %v894, %v922
        %v924 = vpop.f32.mrf.mxu0
        %v925 = vadd.f32 %v896, %v924
        %926 = vmatmul.bf16.gmra.mxu0 %v423
        %v927 = vpop.f32.mrf.mxu0
        %v928 = vadd.f32 %v899, %v927
        %v929 = vpop.f32.mrf.mxu0
        %v930 = vadd.f32 %v901, %v929
        %931 = vmatmul.bf16.gmra.mxu0 %v429
        %v932 = vpop.f32.mrf.mxu0
        %v933 = vadd.f32 %v904, %v932
        %v934 = vpop.f32.mrf.mxu0
        %v935 = vadd.f32 %v906, %v934
        %936 = vmatmul.bf16.gmra.mxu0 %v435
        %v937 = vpop.f32.mrf.mxu0
        %v938 = vadd.f32 %v909, %v937
        %v939 = vpop.f32.mrf.mxu0
        %v940 = vadd.f32 %v911, %v939
        %941 = vdwg.mxu0
        %942 = vmatpush.bf16.msra.mxu0 %v769
        %943 = vmatpush.bf16.msra.mxu0 %v768
        %944 = vmatpush.bf16.msra.mxu0 %v767
        %945 = vmatpush.bf16.msra.mxu0 %v766
        %946 = vmatpush.bf16.msra.mxu0 %v765
        %947 = vmatpush.bf16.msra.mxu0 %v764
        %948 = vmatpush.bf16.msra.mxu0 %v763
        %949 = vmatpush.bf16.msra.mxu0 %v762
        %950 = vmatmul.bf16.gmra.mxu0 %v418
        %v951 = vpop.f32.mrf.mxu0
        %v952 = vadd.f32 %v923, %v951
        %v953 = vpop.f32.mrf.mxu0
        %v954 = vadd.f32 %v925, %v953
        %955 = vmatmul.bf16.gmra.mxu0 %v424
        %v956 = vpop.f32.mrf.mxu0
        %v957 = vadd.f32 %v928, %v956
        %v958 = vpop.f32.mrf.mxu0
        %v959 = vadd.f32 %v930, %v958
        %960 = vmatmul.bf16.gmra.mxu0 %v430
        %v961 = vpop.f32.mrf.mxu0
        %v962 = vadd.f32 %v933, %v961
        %v963 = vpop.f32.mrf.mxu0
        %v964 = vadd.f32 %v935, %v963
        %965 = vmatmul.bf16.gmra.mxu0 %v436
        %v966 = vpop.f32.mrf.mxu0
        %v967 = vadd.f32 %v938, %v966
        %v968 = vpop.f32.mrf.mxu0
        %v969 = vadd.f32 %v940, %v968
        %970 = vdwg.mxu0
        %971 = vmatpush.bf16.msra.mxu0 %v777
        %972 = vmatpush.bf16.msra.mxu0 %v776
        %973 = vmatpush.bf16.msra.mxu0 %v775
        %974 = vmatpush.bf16.msra.mxu0 %v774
        %975 = vmatpush.bf16.msra.mxu0 %v773
        %976 = vmatpush.bf16.msra.mxu0 %v772
        %977 = vmatpush.bf16.msra.mxu0 %v771
        %978 = vmatpush.bf16.msra.mxu0 %v770
        %979 = vmatmul.bf16.gmra.mxu0 %v419
        %v980 = vpop.f32.mrf.mxu0
        %v981 = vadd.f32 %v952, %v980
        %v982 = vpop.f32.mrf.mxu0
        %v983 = vadd.f32 %v954, %v982
        %984 = vmatmul.bf16.gmra.mxu0 %v425
        %v985 = vpop.f32.mrf.mxu0
        %v986 = vadd.f32 %v957, %v985
        %v987 = vpop.f32.mrf.mxu0
        %v988 = vadd.f32 %v959, %v987
        %989 = vmatmul.bf16.gmra.mxu0 %v431
        %v990 = vpop.f32.mrf.mxu0
        %v991 = vadd.f32 %v962, %v990
        %v992 = vpop.f32.mrf.mxu0
        %v993 = vadd.f32 %v964, %v992
        %994 = vmatmul.bf16.gmra.mxu0 %v437
        %v995 = vpop.f32.mrf.mxu0
        %v996 = vadd.f32 %v967, %v995
        %v997 = vpop.f32.mrf.mxu0
        %v998 = vadd.f32 %v969, %v997
        %999 = vdwg.mxu0
        %v1000 = vmax.f32 %v981, 0.0
        %v1001 = vmax.f32 %v983, 0.0
        %v1002 = vmax.f32 %v986, 0.0
        %v1003 = vmax.f32 %v988, 0.0
        %v1004 = vmax.f32 %v991, 0.0
        %v1005 = vmax.f32 %v993, 0.0
        %v1006 = vmax.f32 %v996, 0.0
        %v1007 = vmax.f32 %v998, 0.0
        %v1008 = vpack.c.bf16 %v1001, %v1000
        %v1009 = vpack.c.bf16 %v1003, %v1002
        %v1010 = vpack.c.bf16 %v1005, %v1004
        %v1011 = vpack.c.bf16 %v1007, %v1006
        %v1012 = vld [vmem:[#allocation8] sm:$0xf]
        %v1013 = vld [vmem:[#allocation8 + $0x4] sm:$0xf]
        %v1014 = vld [vmem:[#allocation8 + $0x8] sm:$0xf]
        %v1015 = vld [vmem:[#allocation8 + $0xc] sm:$0xf]
        %v1016 = vld [vmem:[#allocation8 + $0x10] sm:$0xf]
        %v1017 = vld [vmem:[#allocation8 + $0x14] sm:$0xf]
        %v1018 = vld [vmem:[#allocation8 + $0x18] sm:$0xf]
        %v1019 = vld [vmem:[#allocation8 + $0x1c] sm:$0xf]
        %v1020 = vld [vmem:[#allocation8 + $0x20] sm:$0xf]
        %v1021 = vld [vmem:[#allocation8 + $0x24] sm:$0xf]
        %v1022 = vld [vmem:[#allocation8 + $0x28] sm:$0xf]
        %v1023 = vld [vmem:[#allocation8 + $0x2c] sm:$0xf]
        %v1024 = vld [vmem:[#allocation8 + $0x30] sm:$0xf]
        %v1025 = vld [vmem:[#allocation8 + $0x34] sm:$0xf]
        %v1026 = vld [vmem:[#allocation8 + $0x38] sm:$0xf]
        %v1027 = vld [vmem:[#allocation8 + $0x3c] sm:$0xf]
        %v1028 = vld [vmem:[%s4] sm:$0x1]
        %v1030 = vperm.slane %v1028, 0
        %v1048 = vunpack.c.l.b16 %v1012
        %v1049 = vunpack.c.l.b16 %v1013
        %v1050 = vunpack.c.l.b16 %v1014
        %v1051 = vunpack.c.l.b16 %v1015
        %v1052 = vunpack.c.l.b16 %v1016
        %v1053 = vunpack.c.l.b16 %v1017
        %v1054 = vunpack.c.l.b16 %v1018
        %v1055 = vunpack.c.l.b16 %v1019
        %v1056 = vunpack.c.l.b16 %v1020
        %v1057 = vunpack.c.l.b16 %v1021
        %v1058 = vunpack.c.l.b16 %v1022
        %v1059 = vunpack.c.l.b16 %v1023
        %v1060 = vunpack.c.l.b16 %v1024
        %v1061 = vunpack.c.l.b16 %v1025
        %v1062 = vunpack.c.l.b16 %v1026
        %v1063 = vunpack.c.l.b16 %v1027
        %v1064 = vpack.c.b16 %v1049, %v1048
        %v1065 = vpack.c.b16 %v1051, %v1050
        %v1066 = vpack.c.b16 %v1053, %v1052
        %v1067 = vpack.c.b16 %v1055, %v1054
        %v1068 = vpack.c.b16 %v1057, %v1056
        %v1069 = vpack.c.b16 %v1059, %v1058
        %v1070 = vpack.c.b16 %v1061, %v1060
        %v1071 = vpack.c.b16 %v1063, %v1062
        %1080 = vmatpush.bf16.msra.mxu0 %v1071
        %1081 = vmatpush.bf16.msra.mxu0 %v1070
        %1082 = vmatpush.bf16.msra.mxu0 %v1069
        %1083 = vmatpush.bf16.msra.mxu0 %v1068
        %1084 = vmatpush.bf16.msra.mxu0 %v1067
        %1085 = vmatpush.bf16.msra.mxu0 %v1066
        %1086 = vmatpush.bf16.msra.mxu0 %v1065
        %1087 = vmatpush.bf16.msra.mxu0 %v1064
        %1088 = vmatmul.bf16.gmra.mxu0 %v1008
        %v1089 = vpop.f32.mrf.mxu0
        %v1090 = vadd.f32 %v1030, %v1089
        %v1091 = vpop.f32.mrf.mxu0
        %v1092 = vadd.f32 %v1030, %v1091
        %1093 = vmatmul.bf16.gmra.mxu0 %v1009
        %v1094 = vpop.f32.mrf.mxu0
        %v1095 = vadd.f32 %v1030, %v1094
        %v1096 = vpop.f32.mrf.mxu0
        %v1097 = vadd.f32 %v1030, %v1096
        %1098 = vmatmul.bf16.gmra.mxu0 %v1010
        %v1099 = vpop.f32.mrf.mxu0
        %v1100 = vadd.f32 %v1030, %v1099
        %v1101 = vpop.f32.mrf.mxu0
        %v1102 = vadd.f32 %v1030, %v1101
        %1103 = vmatmul.bf16.gmra.mxu0 %v1011
        %v1104 = vpop.f32.mrf.mxu0
        %v1105 = vadd.f32 %v1030, %v1104
        %v1106 = vpop.f32.mrf.mxu0
        %v1107 = vadd.f32 %v1030, %v1106
        %1108 = vdwg.mxu0
        %v1109 = vmax.f32 %v1090, 0.0
        %v1110 = vmax.f32 %v1092, 0.0
        %v1111 = vmax.f32 %v1095, 0.0
        %v1112 = vmax.f32 %v1097, 0.0
        %v1113 = vmax.f32 %v1100, 0.0
        %v1114 = vmax.f32 %v1102, 0.0
        %v1115 = vmax.f32 %v1105, 0.0
        %v1116 = vmax.f32 %v1107, 0.0
        %v1117 = vadd.f32 %v1109, %v1000
        %v1118 = vadd.f32 %v1110, %v1001
        %v1119 = vadd.f32 %v1111, %v1002
        %v1120 = vadd.f32 %v1112, %v1003
        %v1121 = vadd.f32 %v1113, %v1004
        %v1122 = vadd.f32 %v1114, %v1005
        %v1123 = vadd.f32 %v1115, %v1006
        %v1124 = vadd.f32 %v1116, %v1007
        %v1125 = vpack.c.bf16 %v1118, %v1117
        %v1126 = vpack.c.bf16 %v1120, %v1119
        %v1127 = vpack.c.bf16 %v1122, %v1121
        %v1128 = vpack.c.bf16 %v1124, %v1123
        %s1129 = scalar_lea.vmem [#allocation8], 64
        %v1130 = vld [vmem:[%s1129] sm:$0xf]
        %v1131 = vld [vmem:[%s1129 + $0x4] sm:$0xf]
        %v1132 = vld [vmem:[%s1129 + $0x8] sm:$0xf]
        %v1133 = vld [vmem:[%s1129 + $0xc] sm:$0xf]
        %v1134 = vld [vmem:[%s1129 + $0x10] sm:$0xf]
        %v1135 = vld [vmem:[%s1129 + $0x14] sm:$0xf]
        %v1136 = vld [vmem:[%s1129 + $0x18] sm:$0xf]
        %v1137 = vld [vmem:[%s1129 + $0x1c] sm:$0xf]
        %v1138 = vld [vmem:[%s1129 + $0x20] sm:$0xf]
        %v1139 = vld [vmem:[%s1129 + $0x24] sm:$0xf]
        %v1140 = vld [vmem:[%s1129 + $0x28] sm:$0xf]
        %v1141 = vld [vmem:[%s1129 + $0x2c] sm:$0xf]
        %v1142 = vld [vmem:[%s1129 + $0x30] sm:$0xf]
        %v1143 = vld [vmem:[%s1129 + $0x34] sm:$0xf]
        %v1144 = vld [vmem:[%s1129 + $0x38] sm:$0xf]
        %v1145 = vld [vmem:[%s1129 + $0x3c] sm:$0xf]
        %s1146 = scalar_lea.vmem %s4, 1
        %v1147 = vld [vmem:[%s1146] sm:$0x1]
        %v1149 = vperm.slane %v1147, 0
        %v1167 = vunpack.c.l.b16 %v1130
        %v1168 = vunpack.c.l.b16 %v1131
        %v1169 = vunpack.c.l.b16 %v1132
        %v1170 = vunpack.c.l.b16 %v1133
        %v1171 = vunpack.c.l.b16 %v1134
        %v1172 = vunpack.c.l.b16 %v1135
        %v1173 = vunpack.c.l.b16 %v1136
        %v1174 = vunpack.c.l.b16 %v1137
        %v1175 = vunpack.c.l.b16 %v1138
        %v1176 = vunpack.c.l.b16 %v1139
        %v1177 = vunpack.c.l.b16 %v1140
        %v1178 = vunpack.c.l.b16 %v1141
        %v1179 = vunpack.c.l.b16 %v1142
        %v1180 = vunpack.c.l.b16 %v1143
        %v1181 = vunpack.c.l.b16 %v1144
        %v1182 = vunpack.c.l.b16 %v1145
        %v1183 = vpack.c.b16 %v1168, %v1167
        %v1184 = vpack.c.b16 %v1170, %v1169
        %v1185 = vpack.c.b16 %v1172, %v1171
        %v1186 = vpack.c.b16 %v1174, %v1173
        %v1187 = vpack.c.b16 %v1176, %v1175
        %v1188 = vpack.c.b16 %v1178, %v1177
        %v1189 = vpack.c.b16 %v1180, %v1179
        %v1190 = vpack.c.b16 %v1182, %v1181
        %1199 = vmatpush.bf16.msra.mxu0 %v1190
        %1200 = vmatpush.bf16.msra.mxu0 %v1189
        %1201 = vmatpush.bf16.msra.mxu0 %v1188
        %1202 = vmatpush.bf16.msra.mxu0 %v1187
        %1203 = vmatpush.bf16.msra.mxu0 %v1186
        %1204 = vmatpush.bf16.msra.mxu0 %v1185
        %1205 = vmatpush.bf16.msra.mxu0 %v1184
        %1206 = vmatpush.bf16.msra.mxu0 %v1183
        %1207 = vmatmul.bf16.gmra.mxu0 %v1125
        %v1208 = vpop.f32.mrf.mxu0
        %v1209 = vadd.f32 %v1149, %v1208
        %v1210 = vpop.f32.mrf.mxu0
        %v1211 = vadd.f32 %v1149, %v1210
        %1212 = vmatmul.bf16.gmra.mxu0 %v1126
        %v1213 = vpop.f32.mrf.mxu0
        %v1214 = vadd.f32 %v1149, %v1213
        %v1215 = vpop.f32.mrf.mxu0
        %v1216 = vadd.f32 %v1149, %v1215
        %1217 = vmatmul.bf16.gmra.mxu0 %v1127
        %v1218 = vpop.f32.mrf.mxu0
        %v1219 = vadd.f32 %v1149, %v1218
        %v1220 = vpop.f32.mrf.mxu0
        %v1221 = vadd.f32 %v1149, %v1220
        %1222 = vmatmul.bf16.gmra.mxu0 %v1128
        %v1223 = vpop.f32.mrf.mxu0
        %v1224 = vadd.f32 %v1149, %v1223
        %v1225 = vpop.f32.mrf.mxu0
        %v1226 = vadd.f32 %v1149, %v1225
        %1227 = vdwg.mxu0
        %v1228 = vmax.f32 %v1209, 0.0
        %v1229 = vmax.f32 %v1211, 0.0
        %v1230 = vmax.f32 %v1214, 0.0
        %v1231 = vmax.f32 %v1216, 0.0
        %v1232 = vmax.f32 %v1219, 0.0
        %v1233 = vmax.f32 %v1221, 0.0
        %v1234 = vmax.f32 %v1224, 0.0
        %v1235 = vmax.f32 %v1226, 0.0
        %v1236 = vadd.f32 %v1228, %v1117
        %v1237 = vadd.f32 %v1229, %v1118
        %v1238 = vadd.f32 %v1230, %v1119
        %v1239 = vadd.f32 %v1231, %v1120
        %v1240 = vadd.f32 %v1232, %v1121
        %v1241 = vadd.f32 %v1233, %v1122
        %v1242 = vadd.f32 %v1234, %v1123
        %v1243 = vadd.f32 %v1235, %v1124
        %v1244 = vpack.c.bf16 %v1237, %v1236
        %v1245 = vpack.c.bf16 %v1239, %v1238
        %v1246 = vpack.c.bf16 %v1241, %v1240
        %v1247 = vpack.c.bf16 %v1243, %v1242
        %s1248 = scalar_lea.vmem [#allocation8], 128
        %v1249 = vld [vmem:[%s1248] sm:$0xf]
        %v1250 = vld [vmem:[%s1248 + $0x4] sm:$0xf]
        %v1251 = vld [vmem:[%s1248 + $0x8] sm:$0xf]
        %v1252 = vld [vmem:[%s1248 + $0xc] sm:$0xf]
        %v1253 = vld [vmem:[%s1248 + $0x10] sm:$0xf]
        %v1254 = vld [vmem:[%s1248 + $0x14] sm:$0xf]
        %v1255 = vld [vmem:[%s1248 + $0x18] sm:$0xf]
        %v1256 = vld [vmem:[%s1248 + $0x1c] sm:$0xf]
        %v1257 = vld [vmem:[%s1248 + $0x20] sm:$0xf]
        %v1258 = vld [vmem:[%s1248 + $0x24] sm:$0xf]
        %v1259 = vld [vmem:[%s1248 + $0x28] sm:$0xf]
        %v1260 = vld [vmem:[%s1248 + $0x2c] sm:$0xf]
        %v1261 = vld [vmem:[%s1248 + $0x30] sm:$0xf]
        %v1262 = vld [vmem:[%s1248 + $0x34] sm:$0xf]
        %v1263 = vld [vmem:[%s1248 + $0x38] sm:$0xf]
        %v1264 = vld [vmem:[%s1248 + $0x3c] sm:$0xf]
        %s1265 = scalar_lea.vmem %s4, 2
        %v1266 = vld [vmem:[%s1265] sm:$0x1]
        %v1268 = vperm.slane %v1266, 0
        %v1286 = vunpack.c.l.b16 %v1249
        %v1287 = vunpack.c.l.b16 %v1250
        %v1288 = vunpack.c.l.b16 %v1251
        %v1289 = vunpack.c.l.b16 %v1252
        %v1290 = vunpack.c.l.b16 %v1253
        %v1291 = vunpack.c.l.b16 %v1254
        %v1292 = vunpack.c.l.b16 %v1255
        %v1293 = vunpack.c.l.b16 %v1256
        %v1294 = vunpack.c.l.b16 %v1257
        %v1295 = vunpack.c.l.b16 %v1258
        %v1296 = vunpack.c.l.b16 %v1259
        %v1297 = vunpack.c.l.b16 %v1260
        %v1298 = vunpack.c.l.b16 %v1261
        %v1299 = vunpack.c.l.b16 %v1262
        %v1300 = vunpack.c.l.b16 %v1263
        %v1301 = vunpack.c.l.b16 %v1264
        %v1302 = vpack.c.b16 %v1287, %v1286
        %v1303 = vpack.c.b16 %v1289, %v1288
        %v1304 = vpack.c.b16 %v1291, %v1290
        %v1305 = vpack.c.b16 %v1293, %v1292
        %v1306 = vpack.c.b16 %v1295, %v1294
        %v1307 = vpack.c.b16 %v1297, %v1296
        %v1308 = vpack.c.b16 %v1299, %v1298
        %v1309 = vpack.c.b16 %v1301, %v1300
        %1318 = vmatpush.bf16.msra.mxu0 %v1309
        %1319 = vmatpush.bf16.msra.mxu0 %v1308
        %1320 = vmatpush.bf16.msra.mxu0 %v1307
        %1321 = vmatpush.bf16.msra.mxu0 %v1306
        %1322 = vmatpush.bf16.msra.mxu0 %v1305
        %1323 = vmatpush.bf16.msra.mxu0 %v1304
        %1324 = vmatpush.bf16.msra.mxu0 %v1303
        %1325 = vmatpush.bf16.msra.mxu0 %v1302
        %1326 = vmatmul.bf16.gmra.mxu0 %v1244
        %v1327 = vpop.f32.mrf.mxu0
        %v1328 = vadd.f32 %v1268, %v1327
        %v1329 = vpop.f32.mrf.mxu0
        %v1330 = vadd.f32 %v1268, %v1329
        %1331 = vmatmul.bf16.gmra.mxu0 %v1245
        %v1332 = vpop.f32.mrf.mxu0
        %v1333 = vadd.f32 %v1268, %v1332
        %v1334 = vpop.f32.mrf.mxu0
        %v1335 = vadd.f32 %v1268, %v1334
        %1336 = vmatmul.bf16.gmra.mxu0 %v1246
        %v1337 = vpop.f32.mrf.mxu0
        %v1338 = vadd.f32 %v1268, %v1337
        %v1339 = vpop.f32.mrf.mxu0
        %v1340 = vadd.f32 %v1268, %v1339
        %1341 = vmatmul.bf16.gmra.mxu0 %v1247
        %v1342 = vpop.f32.mrf.mxu0
        %v1343 = vadd.f32 %v1268, %v1342
        %v1344 = vpop.f32.mrf.mxu0
        %v1345 = vadd.f32 %v1268, %v1344
        %1346 = vdwg.mxu0
        %v1347 = vmax.f32 %v1328, 0.0
        %v1348 = vmax.f32 %v1330, 0.0
        %v1349 = vmax.f32 %v1333, 0.0
        %v1350 = vmax.f32 %v1335, 0.0
        %v1351 = vmax.f32 %v1338, 0.0
        %v1352 = vmax.f32 %v1340, 0.0
        %v1353 = vmax.f32 %v1343, 0.0
        %v1354 = vmax.f32 %v1345, 0.0
        %v1355 = vadd.f32 %v1347, %v1236
        %v1356 = vadd.f32 %v1348, %v1237
        %v1357 = vadd.f32 %v1349, %v1238
        %v1358 = vadd.f32 %v1350, %v1239
        %v1359 = vadd.f32 %v1351, %v1240
        %v1360 = vadd.f32 %v1352, %v1241
        %v1361 = vadd.f32 %v1353, %v1242
        %v1362 = vadd.f32 %v1354, %v1243
        %v1363 = vpack.c.bf16 %v1356, %v1355
        %v1364 = vpack.c.bf16 %v1358, %v1357
        %v1365 = vpack.c.bf16 %v1360, %v1359
        %v1366 = vpack.c.bf16 %v1362, %v1361
        %v1367 = vld [vmem:[#allocation10] sm:$0xf]
        %v1368 = vld [vmem:[#allocation10 + $0x4] sm:$0xf]
        %v1369 = vld [vmem:[#allocation10 + $0x8] sm:$0xf]
        %v1370 = vld [vmem:[#allocation10 + $0xc] sm:$0xf]
        %v1371 = vld [vmem:[#allocation10 + $0x10] sm:$0xf]
        %v1372 = vld [vmem:[#allocation10 + $0x14] sm:$0xf]
        %v1373 = vld [vmem:[#allocation10 + $0x18] sm:$0xf]
        %v1374 = vld [vmem:[#allocation10 + $0x1c] sm:$0xf]
        %v1375 = vld [vmem:[#allocation10 + $0x20] sm:$0xf]
        %v1376 = vld [vmem:[#allocation10 + $0x24] sm:$0xf]
        %v1377 = vld [vmem:[#allocation10 + $0x28] sm:$0xf]
        %v1378 = vld [vmem:[#allocation10 + $0x2c] sm:$0xf]
        %v1379 = vld [vmem:[#allocation10 + $0x30] sm:$0xf]
        %v1380 = vld [vmem:[#allocation10 + $0x34] sm:$0xf]
        %v1381 = vld [vmem:[#allocation10 + $0x38] sm:$0xf]
        %v1382 = vld [vmem:[#allocation10 + $0x3c] sm:$0xf]
        %v1383 = vld [vmem:[%s6] sm:$0x1]
        %v1385 = vperm.slane %v1383, 0
        %v1403 = vunpack.c.l.b16 %v1367
        %v1404 = vunpack.c.l.b16 %v1368
        %v1405 = vunpack.c.l.b16 %v1369
        %v1406 = vunpack.c.l.b16 %v1370
        %v1407 = vunpack.c.l.b16 %v1371
        %v1408 = vunpack.c.l.b16 %v1372
        %v1409 = vunpack.c.l.b16 %v1373
        %v1410 = vunpack.c.l.b16 %v1374
        %v1411 = vunpack.c.l.b16 %v1375
        %v1412 = vunpack.c.l.b16 %v1376
        %v1413 = vunpack.c.l.b16 %v1377
        %v1414 = vunpack.c.l.b16 %v1378
        %v1415 = vunpack.c.l.b16 %v1379
        %v1416 = vunpack.c.l.b16 %v1380
        %v1417 = vunpack.c.l.b16 %v1381
        %v1418 = vunpack.c.l.b16 %v1382
        %v1419 = vpack.c.b16 %v1404, %v1403
        %v1420 = vpack.c.b16 %v1406, %v1405
        %v1421 = vpack.c.b16 %v1408, %v1407
        %v1422 = vpack.c.b16 %v1410, %v1409
        %v1423 = vpack.c.b16 %v1412, %v1411
        %v1424 = vpack.c.b16 %v1414, %v1413
        %v1425 = vpack.c.b16 %v1416, %v1415
        %v1426 = vpack.c.b16 %v1418, %v1417
        %1435 = vmatpush.bf16.msra.mxu0 %v1426
        %1436 = vmatpush.bf16.msra.mxu0 %v1425
        %1437 = vmatpush.bf16.msra.mxu0 %v1424
        %1438 = vmatpush.bf16.msra.mxu0 %v1423
        %1439 = vmatpush.bf16.msra.mxu0 %v1422
        %1440 = vmatpush.bf16.msra.mxu0 %v1421
        %1441 = vmatpush.bf16.msra.mxu0 %v1420
        %1442 = vmatpush.bf16.msra.mxu0 %v1419
        %1443 = vmatmul.bf16.gmra.mxu0 %v1363
        %v1444 = vpop.f32.mrf.mxu0
        %v1445 = vadd.f32 %v1385, %v1444
        %v1446 = vpop.f32.mrf.mxu0
        %v1447 = vadd.f32 %v1385, %v1446
        %1448 = vmatmul.bf16.gmra.mxu0 %v1364
        %v1449 = vpop.f32.mrf.mxu0
        %v1450 = vadd.f32 %v1385, %v1449
        %v1451 = vpop.f32.mrf.mxu0
        %v1452 = vadd.f32 %v1385, %v1451
        %1453 = vmatmul.bf16.gmra.mxu0 %v1365
        %v1454 = vpop.f32.mrf.mxu0
        %v1455 = vadd.f32 %v1385, %v1454
        %v1456 = vpop.f32.mrf.mxu0
        %v1457 = vadd.f32 %v1385, %v1456
        %1458 = vmatmul.bf16.gmra.mxu0 %v1366
        %v1459 = vpop.f32.mrf.mxu0
        %v1460 = vadd.f32 %v1385, %v1459
        %v1461 = vpop.f32.mrf.mxu0
        %v1462 = vadd.f32 %v1385, %v1461
        %1463 = vdwg.mxu0
        %1464 = vst [vmem:[%s363] sm:$0xff] %v1445
        %1465 = vst [vmem:[%s363 + $0x8] sm:$0xff] %v1447
        %1466 = vst [vmem:[%s363 + $0x10] sm:$0xff] %v1450
        %1467 = vst [vmem:[%s363 + $0x18] sm:$0xff] %v1452
        %1468 = vst [vmem:[%s363 + $0x20] sm:$0xff] %v1455
        %1469 = vst [vmem:[%s363 + $0x28] sm:$0xff] %v1457
        %1470 = vst [vmem:[%s363 + $0x30] sm:$0xff] %v1460
        %1471 = vst [vmem:[%s363 + $0x38] sm:$0xff] %v1462
        %v1472 = vld [vmem:[%s312 + $0x180] sm:$0xff]
        %v1473 = vld [vmem:[%s312 + $0x188] sm:$0xff]
        %v1474 = vld [vmem:[%s312 + $0x190] sm:$0xff]
        %v1475 = vld [vmem:[%s312 + $0x198] sm:$0xff]
        %v1476 = vld [vmem:[%s312 + $0x1a0] sm:$0xff]
        %v1477 = vld [vmem:[%s312 + $0x1a8] sm:$0xff]
        %v1478 = vld [vmem:[%s312 + $0x1b0] sm:$0xff]
        %v1479 = vld [vmem:[%s312 + $0x1b8] sm:$0xff]
        %v1480 = vld [vmem:[%s312 + $0x1c0] sm:$0xff]
        %v1481 = vld [vmem:[%s312 + $0x1c8] sm:$0xff]
        %v1482 = vld [vmem:[%s312 + $0x1d0] sm:$0xff]
        %v1483 = vld [vmem:[%s312 + $0x1d8] sm:$0xff]
        %v1484 = vld [vmem:[%s312 + $0x1e0] sm:$0xff]
        %v1485 = vld [vmem:[%s312 + $0x1e8] sm:$0xff]
        %v1486 = vld [vmem:[%s312 + $0x1f0] sm:$0xff]
        %v1487 = vld [vmem:[%s312 + $0x1f8] sm:$0xff]
        %v1488 = vld [vmem:[%s312 + $0x200] sm:$0xff]
        %v1489 = vld [vmem:[%s312 + $0x208] sm:$0xff]
        %v1490 = vld [vmem:[%s312 + $0x210] sm:$0xff]
        %v1491 = vld [vmem:[%s312 + $0x218] sm:$0xff]
        %v1492 = vld [vmem:[%s312 + $0x220] sm:$0xff]
        %v1493 = vld [vmem:[%s312 + $0x228] sm:$0xff]
        %v1494 = vld [vmem:[%s312 + $0x230] sm:$0xff]
        %v1495 = vld [vmem:[%s312 + $0x238] sm:$0xff]
        %v1496 = vld [vmem:[%s312 + $0x240] sm:$0xff]
        %v1497 = vld [vmem:[%s312 + $0x248] sm:$0xff]
        %v1498 = vld [vmem:[%s312 + $0x250] sm:$0xff]
        %v1499 = vld [vmem:[%s312 + $0x258] sm:$0xff]
        %v1500 = vld [vmem:[%s312 + $0x260] sm:$0xff]
        %v1501 = vld [vmem:[%s312 + $0x268] sm:$0xff]
        %v1502 = vld [vmem:[%s312 + $0x270] sm:$0xff]
        %v1503 = vld [vmem:[%s312 + $0x278] sm:$0xff]
        %v1504 = vld [vmem:[%s312 + $0x280] sm:$0xff]
        %v1505 = vld [vmem:[%s312 + $0x288] sm:$0xff]
        %v1506 = vld [vmem:[%s312 + $0x290] sm:$0xff]
        %v1507 = vld [vmem:[%s312 + $0x298] sm:$0xff]
        %v1508 = vld [vmem:[%s312 + $0x2a0] sm:$0xff]
        %v1509 = vld [vmem:[%s312 + $0x2a8] sm:$0xff]
        %v1510 = vld [vmem:[%s312 + $0x2b0] sm:$0xff]
        %v1511 = vld [vmem:[%s312 + $0x2b8] sm:$0xff]
        %v1512 = vld [vmem:[%s312 + $0x2c0] sm:$0xff]
        %v1513 = vld [vmem:[%s312 + $0x2c8] sm:$0xff]
        %v1514 = vld [vmem:[%s312 + $0x2d0] sm:$0xff]
        %v1515 = vld [vmem:[%s312 + $0x2d8] sm:$0xff]
        %v1516 = vld [vmem:[%s312 + $0x2e0] sm:$0xff]
        %v1517 = vld [vmem:[%s312 + $0x2e8] sm:$0xff]
        %v1518 = vld [vmem:[%s312 + $0x2f0] sm:$0xff]
        %v1519 = vld [vmem:[%s312 + $0x2f8] sm:$0xff]
        %v1520 = vpack.c.bf16 %v1478, %v1472
        %v1521 = vpack.c.bf16 %v1479, %v1473
        %v1522 = vpack.c.bf16 %v1480, %v1474
        %v1523 = vpack.c.bf16 %v1481, %v1475
        %v1524 = vpack.c.bf16 %v1482, %v1476
        %v1525 = vpack.c.bf16 %v1483, %v1477
        %v1526 = vpack.c.bf16 %v1490, %v1484
        %v1527 = vpack.c.bf16 %v1491, %v1485
        %v1528 = vpack.c.bf16 %v1492, %v1486
        %v1529 = vpack.c.bf16 %v1493, %v1487
        %v1530 = vpack.c.bf16 %v1494, %v1488
        %v1531 = vpack.c.bf16 %v1495, %v1489
        %v1532 = vpack.c.bf16 %v1502, %v1496
        %v1533 = vpack.c.bf16 %v1503, %v1497
        %v1534 = vpack.c.bf16 %v1504, %v1498
        %v1535 = vpack.c.bf16 %v1505, %v1499
        %v1536 = vpack.c.bf16 %v1506, %v1500
        %v1537 = vpack.c.bf16 %v1507, %v1501
        %v1538 = vpack.c.bf16 %v1514, %v1508
        %v1539 = vpack.c.bf16 %v1515, %v1509
        %v1540 = vpack.c.bf16 %v1516, %v1510
        %v1541 = vpack.c.bf16 %v1517, %v1511
        %v1542 = vpack.c.bf16 %v1518, %v1512
        %v1543 = vpack.c.bf16 %v1519, %v1513
        %v1544 = vld [vmem:[#allocation5] sm:$0xf]
        %v1545 = vld [vmem:[#allocation5 + $0x4] sm:$0xf]
        %v1546 = vld [vmem:[#allocation5 + $0x8] sm:$0xf]
        %v1547 = vld [vmem:[#allocation5 + $0xc] sm:$0xf]
        %v1548 = vld [vmem:[#allocation5 + $0x10] sm:$0xf]
        %v1549 = vld [vmem:[#allocation5 + $0x14] sm:$0xf]
        %v1550 = vld [vmem:[#allocation5 + $0x18] sm:$0xf]
        %v1551 = vld [vmem:[#allocation5 + $0x1c] sm:$0xf]
        %v1552 = vld [vmem:[#allocation5 + $0x20] sm:$0xf]
        %v1553 = vld [vmem:[#allocation5 + $0x24] sm:$0xf]
        %v1554 = vld [vmem:[#allocation5 + $0x28] sm:$0xf]
        %v1555 = vld [vmem:[#allocation5 + $0x2c] sm:$0xf]
        %v1556 = vld [vmem:[#allocation5 + $0x30] sm:$0xf]
        %v1557 = vld [vmem:[#allocation5 + $0x34] sm:$0xf]
        %v1558 = vld [vmem:[#allocation5 + $0x38] sm:$0xf]
        %v1559 = vld [vmem:[#allocation5 + $0x3c] sm:$0xf]
        %v1560 = vld [vmem:[#allocation5 + $0x40] sm:$0xf]
        %v1561 = vld [vmem:[#allocation5 + $0x44] sm:$0xf]
        %v1562 = vld [vmem:[#allocation5 + $0x48] sm:$0xf]
        %v1563 = vld [vmem:[#allocation5 + $0x4c] sm:$0xf]
        %v1564 = vld [vmem:[#allocation5 + $0x50] sm:$0xf]
        %v1565 = vld [vmem:[#allocation5 + $0x54] sm:$0xf]
        %v1566 = vld [vmem:[#allocation5 + $0x58] sm:$0xf]
        %v1567 = vld [vmem:[#allocation5 + $0x5c] sm:$0xf]
        %v1568 = vld [vmem:[#allocation5 + $0x60] sm:$0xf]
        %v1569 = vld [vmem:[#allocation5 + $0x64] sm:$0xf]
        %v1570 = vld [vmem:[#allocation5 + $0x68] sm:$0xf]
        %v1571 = vld [vmem:[#allocation5 + $0x6c] sm:$0xf]
        %v1572 = vld [vmem:[#allocation5 + $0x70] sm:$0xf]
        %v1573 = vld [vmem:[#allocation5 + $0x74] sm:$0xf]
        %v1574 = vld [vmem:[#allocation5 + $0x78] sm:$0xf]
        %v1575 = vld [vmem:[#allocation5 + $0x7c] sm:$0xf]
        %v1576 = vld [vmem:[#allocation5 + $0x80] sm:$0xf]
        %v1577 = vld [vmem:[#allocation5 + $0x84] sm:$0xf]
        %v1578 = vld [vmem:[#allocation5 + $0x88] sm:$0xf]
        %v1579 = vld [vmem:[#allocation5 + $0x8c] sm:$0xf]
        %v1580 = vld [vmem:[#allocation5 + $0x90] sm:$0xf]
        %v1581 = vld [vmem:[#allocation5 + $0x94] sm:$0xf]
        %v1582 = vld [vmem:[#allocation5 + $0x98] sm:$0xf]
        %v1583 = vld [vmem:[#allocation5 + $0x9c] sm:$0xf]
        %v1584 = vld [vmem:[#allocation5 + $0xa0] sm:$0xf]
        %v1585 = vld [vmem:[#allocation5 + $0xa4] sm:$0xf]
        %v1586 = vld [vmem:[#allocation5 + $0xa8] sm:$0xf]
        %v1587 = vld [vmem:[#allocation5 + $0xac] sm:$0xf]
        %v1588 = vld [vmem:[#allocation5 + $0xb0] sm:$0xf]
        %v1589 = vld [vmem:[#allocation5 + $0xb4] sm:$0xf]
        %v1590 = vld [vmem:[#allocation5 + $0xb8] sm:$0xf]
        %v1591 = vld [vmem:[#allocation5 + $0xbc] sm:$0xf]
        %v1592 = vld [vmem:[#allocation5 + $0xc0] sm:$0xf]
        %v1593 = vld [vmem:[#allocation5 + $0xc4] sm:$0xf]
        %v1594 = vld [vmem:[#allocation5 + $0xc8] sm:$0xf]
        %v1595 = vld [vmem:[#allocation5 + $0xcc] sm:$0xf]
        %v1596 = vld [vmem:[#allocation5 + $0xd0] sm:$0xf]
        %v1597 = vld [vmem:[#allocation5 + $0xd4] sm:$0xf]
        %v1598 = vld [vmem:[#allocation5 + $0xd8] sm:$0xf]
        %v1599 = vld [vmem:[#allocation5 + $0xdc] sm:$0xf]
        %v1600 = vld [vmem:[#allocation5 + $0xe0] sm:$0xf]
        %v1601 = vld [vmem:[#allocation5 + $0xe4] sm:$0xf]
        %v1602 = vld [vmem:[#allocation5 + $0xe8] sm:$0xf]
        %v1603 = vld [vmem:[#allocation5 + $0xec] sm:$0xf]
        %v1604 = vld [vmem:[#allocation5 + $0xf0] sm:$0xf]
        %v1605 = vld [vmem:[#allocation5 + $0xf4] sm:$0xf]
        %v1606 = vld [vmem:[#allocation5 + $0xf8] sm:$0xf]
        %v1607 = vld [vmem:[#allocation5 + $0xfc] sm:$0xf]
        %v1608 = vld [vmem:[#allocation5 + $0x100] sm:$0xf]
        %v1609 = vld [vmem:[#allocation5 + $0x104] sm:$0xf]
        %v1610 = vld [vmem:[#allocation5 + $0x108] sm:$0xf]
        %v1611 = vld [vmem:[#allocation5 + $0x10c] sm:$0xf]
        %v1612 = vld [vmem:[#allocation5 + $0x110] sm:$0xf]
        %v1613 = vld [vmem:[#allocation5 + $0x114] sm:$0xf]
        %v1614 = vld [vmem:[#allocation5 + $0x118] sm:$0xf]
        %v1615 = vld [vmem:[#allocation5 + $0x11c] sm:$0xf]
        %v1616 = vld [vmem:[#allocation5 + $0x120] sm:$0xf]
        %v1617 = vld [vmem:[#allocation5 + $0x124] sm:$0xf]
        %v1618 = vld [vmem:[#allocation5 + $0x128] sm:$0xf]
        %v1619 = vld [vmem:[#allocation5 + $0x12c] sm:$0xf]
        %v1620 = vld [vmem:[#allocation5 + $0x130] sm:$0xf]
        %v1621 = vld [vmem:[#allocation5 + $0x134] sm:$0xf]
        %v1622 = vld [vmem:[#allocation5 + $0x138] sm:$0xf]
        %v1623 = vld [vmem:[#allocation5 + $0x13c] sm:$0xf]
        %v1624 = vld [vmem:[#allocation5 + $0x140] sm:$0xf]
        %v1625 = vld [vmem:[#allocation5 + $0x144] sm:$0xf]
        %v1626 = vld [vmem:[#allocation5 + $0x148] sm:$0xf]
        %v1627 = vld [vmem:[#allocation5 + $0x14c] sm:$0xf]
        %v1628 = vld [vmem:[#allocation5 + $0x150] sm:$0xf]
        %v1629 = vld [vmem:[#allocation5 + $0x154] sm:$0xf]
        %v1630 = vld [vmem:[#allocation5 + $0x158] sm:$0xf]
        %v1631 = vld [vmem:[#allocation5 + $0x15c] sm:$0xf]
        %v1632 = vld [vmem:[#allocation5 + $0x160] sm:$0xf]
        %v1633 = vld [vmem:[#allocation5 + $0x164] sm:$0xf]
        %v1634 = vld [vmem:[#allocation5 + $0x168] sm:$0xf]
        %v1635 = vld [vmem:[#allocation5 + $0x16c] sm:$0xf]
        %v1636 = vld [vmem:[#allocation5 + $0x170] sm:$0xf]
        %v1637 = vld [vmem:[#allocation5 + $0x174] sm:$0xf]
        %v1638 = vld [vmem:[#allocation5 + $0x178] sm:$0xf]
        %v1639 = vld [vmem:[#allocation5 + $0x17c] sm:$0xf]
        %v1640 = vld [vmem:[#allocation7] sm:$0x1]
        %v1642 = vperm.slane %v1640, 0
        %v1740 = vunpack.c.l.b16 %v1544
        %v1741 = vunpack.c.l.b16 %v1545
        %v1742 = vunpack.c.l.b16 %v1546
        %v1743 = vunpack.c.l.b16 %v1547
        %v1744 = vunpack.c.l.b16 %v1548
        %v1745 = vunpack.c.l.b16 %v1549
        %v1746 = vunpack.c.l.b16 %v1550
        %v1747 = vunpack.c.l.b16 %v1551
        %v1748 = vunpack.c.l.b16 %v1552
        %v1749 = vunpack.c.l.b16 %v1553
        %v1750 = vunpack.c.l.b16 %v1554
        %v1751 = vunpack.c.l.b16 %v1555
        %v1752 = vunpack.c.l.b16 %v1556
        %v1753 = vunpack.c.l.b16 %v1557
        %v1754 = vunpack.c.l.b16 %v1558
        %v1755 = vunpack.c.l.b16 %v1559
        %v1756 = vunpack.c.l.b16 %v1560
        %v1757 = vunpack.c.l.b16 %v1561
        %v1758 = vunpack.c.l.b16 %v1562
        %v1759 = vunpack.c.l.b16 %v1563
        %v1760 = vunpack.c.l.b16 %v1564
        %v1761 = vunpack.c.l.b16 %v1565
        %v1762 = vunpack.c.l.b16 %v1566
        %v1763 = vunpack.c.l.b16 %v1567
        %v1764 = vunpack.c.l.b16 %v1568
        %v1765 = vunpack.c.l.b16 %v1569
        %v1766 = vunpack.c.l.b16 %v1570
        %v1767 = vunpack.c.l.b16 %v1571
        %v1768 = vunpack.c.l.b16 %v1572
        %v1769 = vunpack.c.l.b16 %v1573
        %v1770 = vunpack.c.l.b16 %v1574
        %v1771 = vunpack.c.l.b16 %v1575
        %v1772 = vunpack.c.l.b16 %v1576
        %v1773 = vunpack.c.l.b16 %v1577
        %v1774 = vunpack.c.l.b16 %v1578
        %v1775 = vunpack.c.l.b16 %v1579
        %v1776 = vunpack.c.l.b16 %v1580
        %v1777 = vunpack.c.l.b16 %v1581
        %v1778 = vunpack.c.l.b16 %v1582
        %v1779 = vunpack.c.l.b16 %v1583
        %v1780 = vunpack.c.l.b16 %v1584
        %v1781 = vunpack.c.l.b16 %v1585
        %v1782 = vunpack.c.l.b16 %v1586
        %v1783 = vunpack.c.l.b16 %v1587
        %v1784 = vunpack.c.l.b16 %v1588
        %v1785 = vunpack.c.l.b16 %v1589
        %v1786 = vunpack.c.l.b16 %v1590
        %v1787 = vunpack.c.l.b16 %v1591
        %v1788 = vunpack.c.l.b16 %v1592
        %v1789 = vunpack.c.l.b16 %v1593
        %v1790 = vunpack.c.l.b16 %v1594
        %v1791 = vunpack.c.l.b16 %v1595
        %v1792 = vunpack.c.l.b16 %v1596
        %v1793 = vunpack.c.l.b16 %v1597
        %v1794 = vunpack.c.l.b16 %v1598
        %v1795 = vunpack.c.l.b16 %v1599
        %v1796 = vunpack.c.l.b16 %v1600
        %v1797 = vunpack.c.l.b16 %v1601
        %v1798 = vunpack.c.l.b16 %v1602
        %v1799 = vunpack.c.l.b16 %v1603
        %v1800 = vunpack.c.l.b16 %v1604
        %v1801 = vunpack.c.l.b16 %v1605
        %v1802 = vunpack.c.l.b16 %v1606
        %v1803 = vunpack.c.l.b16 %v1607
        %v1804 = vunpack.c.l.b16 %v1608
        %v1805 = vunpack.c.l.b16 %v1609
        %v1806 = vunpack.c.l.b16 %v1610
        %v1807 = vunpack.c.l.b16 %v1611
        %v1808 = vunpack.c.l.b16 %v1612
        %v1809 = vunpack.c.l.b16 %v1613
        %v1810 = vunpack.c.l.b16 %v1614
        %v1811 = vunpack.c.l.b16 %v1615
        %v1812 = vunpack.c.l.b16 %v1616
        %v1813 = vunpack.c.l.b16 %v1617
        %v1814 = vunpack.c.l.b16 %v1618
        %v1815 = vunpack.c.l.b16 %v1619
        %v1816 = vunpack.c.l.b16 %v1620
        %v1817 = vunpack.c.l.b16 %v1621
        %v1818 = vunpack.c.l.b16 %v1622
        %v1819 = vunpack.c.l.b16 %v1623
        %v1820 = vunpack.c.l.b16 %v1624
        %v1821 = vunpack.c.l.b16 %v1625
        %v1822 = vunpack.c.l.b16 %v1626
        %v1823 = vunpack.c.l.b16 %v1627
        %v1824 = vunpack.c.l.b16 %v1628
        %v1825 = vunpack.c.l.b16 %v1629
        %v1826 = vunpack.c.l.b16 %v1630
        %v1827 = vunpack.c.l.b16 %v1631
        %v1828 = vunpack.c.l.b16 %v1632
        %v1829 = vunpack.c.l.b16 %v1633
        %v1830 = vunpack.c.l.b16 %v1634
        %v1831 = vunpack.c.l.b16 %v1635
        %v1832 = vunpack.c.l.b16 %v1636
        %v1833 = vunpack.c.l.b16 %v1637
        %v1834 = vunpack.c.l.b16 %v1638
        %v1835 = vunpack.c.l.b16 %v1639
        %v1836 = vpack.c.b16 %v1741, %v1740
        %v1837 = vpack.c.b16 %v1743, %v1742
        %v1838 = vpack.c.b16 %v1745, %v1744
        %v1839 = vpack.c.b16 %v1747, %v1746
        %v1840 = vpack.c.b16 %v1749, %v1748
        %v1841 = vpack.c.b16 %v1751, %v1750
        %v1842 = vpack.c.b16 %v1753, %v1752
        %v1843 = vpack.c.b16 %v1755, %v1754
        %v1844 = vpack.c.b16 %v1757, %v1756
        %v1845 = vpack.c.b16 %v1759, %v1758
        %v1846 = vpack.c.b16 %v1761, %v1760
        %v1847 = vpack.c.b16 %v1763, %v1762
        %v1848 = vpack.c.b16 %v1765, %v1764
        %v1849 = vpack.c.b16 %v1767, %v1766
        %v1850 = vpack.c.b16 %v1769, %v1768
        %v1851 = vpack.c.b16 %v1771, %v1770
        %v1852 = vpack.c.b16 %v1773, %v1772
        %v1853 = vpack.c.b16 %v1775, %v1774
        %v1854 = vpack.c.b16 %v1777, %v1776
        %v1855 = vpack.c.b16 %v1779, %v1778
        %v1856 = vpack.c.b16 %v1781, %v1780
        %v1857 = vpack.c.b16 %v1783, %v1782
        %v1858 = vpack.c.b16 %v1785, %v1784
        %v1859 = vpack.c.b16 %v1787, %v1786
        %v1860 = vpack.c.b16 %v1789, %v1788
        %v1861 = vpack.c.b16 %v1791, %v1790
        %v1862 = vpack.c.b16 %v1793, %v1792
        %v1863 = vpack.c.b16 %v1795, %v1794
        %v1864 = vpack.c.b16 %v1797, %v1796
        %v1865 = vpack.c.b16 %v1799, %v1798
        %v1866 = vpack.c.b16 %v1801, %v1800
        %v1867 = vpack.c.b16 %v1803, %v1802
        %v1868 = vpack.c.b16 %v1805, %v1804
        %v1869 = vpack.c.b16 %v1807, %v1806
        %v1870 = vpack.c.b16 %v1809, %v1808
        %v1871 = vpack.c.b16 %v1811, %v1810
        %v1872 = vpack.c.b16 %v1813, %v1812
        %v1873 = vpack.c.b16 %v1815, %v1814
        %v1874 = vpack.c.b16 %v1817, %v1816
        %v1875 = vpack.c.b16 %v1819, %v1818
        %v1876 = vpack.c.b16 %v1821, %v1820
        %v1877 = vpack.c.b16 %v1823, %v1822
        %v1878 = vpack.c.b16 %v1825, %v1824
        %v1879 = vpack.c.b16 %v1827, %v1826
        %v1880 = vpack.c.b16 %v1829, %v1828
        %v1881 = vpack.c.b16 %v1831, %v1830
        %v1882 = vpack.c.b16 %v1833, %v1832
        %v1883 = vpack.c.b16 %v1835, %v1834
        %1932 = vmatpush.bf16.msra.mxu0 %v1843
        %1933 = vmatpush.bf16.msra.mxu0 %v1842
        %1934 = vmatpush.bf16.msra.mxu0 %v1841
        %1935 = vmatpush.bf16.msra.mxu0 %v1840
        %1936 = vmatpush.bf16.msra.mxu0 %v1839
        %1937 = vmatpush.bf16.msra.mxu0 %v1838
        %1938 = vmatpush.bf16.msra.mxu0 %v1837
        %1939 = vmatpush.bf16.msra.mxu0 %v1836
        %1940 = vmatmul.bf16.gmra.mxu0 %v1520
        %v1941 = vpop.f32.mrf.mxu0
        %v1942 = vadd.f32 %v1642, %v1941
        %v1943 = vpop.f32.mrf.mxu0
        %v1944 = vadd.f32 %v1642, %v1943
        %1945 = vmatmul.bf16.gmra.mxu0 %v1526
        %v1946 = vpop.f32.mrf.mxu0
        %v1947 = vadd.f32 %v1642, %v1946
        %v1948 = vpop.f32.mrf.mxu0
        %v1949 = vadd.f32 %v1642, %v1948
        %1950 = vmatmul.bf16.gmra.mxu0 %v1532
        %v1951 = vpop.f32.mrf.mxu0
        %v1952 = vadd.f32 %v1642, %v1951
        %v1953 = vpop.f32.mrf.mxu0
        %v1954 = vadd.f32 %v1642, %v1953
        %1955 = vmatmul.bf16.gmra.mxu0 %v1538
        %v1956 = vpop.f32.mrf.mxu0
        %v1957 = vadd.f32 %v1642, %v1956
        %v1958 = vpop.f32.mrf.mxu0
        %v1959 = vadd.f32 %v1642, %v1958
        %1960 = vdwg.mxu0
        %1961 = vmatpush.bf16.msra.mxu0 %v1851
        %1962 = vmatpush.bf16.msra.mxu0 %v1850
        %1963 = vmatpush.bf16.msra.mxu0 %v1849
        %1964 = vmatpush.bf16.msra.mxu0 %v1848
        %1965 = vmatpush.bf16.msra.mxu0 %v1847
        %1966 = vmatpush.bf16.msra.mxu0 %v1846
        %1967 = vmatpush.bf16.msra.mxu0 %v1845
        %1968 = vmatpush.bf16.msra.mxu0 %v1844
        %1969 = vmatmul.bf16.gmra.mxu0 %v1521
        %v1970 = vpop.f32.mrf.mxu0
        %v1971 = vadd.f32 %v1942, %v1970
        %v1972 = vpop.f32.mrf.mxu0
        %v1973 = vadd.f32 %v1944, %v1972
        %1974 = vmatmul.bf16.gmra.mxu0 %v1527
        %v1975 = vpop.f32.mrf.mxu0
        %v1976 = vadd.f32 %v1947, %v1975
        %v1977 = vpop.f32.mrf.mxu0
        %v1978 = vadd.f32 %v1949, %v1977
        %1979 = vmatmul.bf16.gmra.mxu0 %v1533
        %v1980 = vpop.f32.mrf.mxu0
        %v1981 = vadd.f32 %v1952, %v1980
        %v1982 = vpop.f32.mrf.mxu0
        %v1983 = vadd.f32 %v1954, %v1982
        %1984 = vmatmul.bf16.gmra.mxu0 %v1539
        %v1985 = vpop.f32.mrf.mxu0
        %v1986 = vadd.f32 %v1957, %v1985
        %v1987 = vpop.f32.mrf.mxu0
        %v1988 = vadd.f32 %v1959, %v1987
        %1989 = vdwg.mxu0
        %1990 = vmatpush.bf16.msra.mxu0 %v1859
        %1991 = vmatpush.bf16.msra.mxu0 %v1858
        %1992 = vmatpush.bf16.msra.mxu0 %v1857
        %1993 = vmatpush.bf16.msra.mxu0 %v1856
        %1994 = vmatpush.bf16.msra.mxu0 %v1855
        %1995 = vmatpush.bf16.msra.mxu0 %v1854
        %1996 = vmatpush.bf16.msra.mxu0 %v1853
        %1997 = vmatpush.bf16.msra.mxu0 %v1852
        %1998 = vmatmul.bf16.gmra.mxu0 %v1522
        %v1999 = vpop.f32.mrf.mxu0
        %v2000 = vadd.f32 %v1971, %v1999
        %v2001 = vpop.f32.mrf.mxu0
        %v2002 = vadd.f32 %v1973, %v2001
        %2003 = vmatmul.bf16.gmra.mxu0 %v1528
        %v2004 = vpop.f32.mrf.mxu0
        %v2005 = vadd.f32 %v1976, %v2004
        %v2006 = vpop.f32.mrf.mxu0
        %v2007 = vadd.f32 %v1978, %v2006
        %2008 = vmatmul.bf16.gmra.mxu0 %v1534
        %v2009 = vpop.f32.mrf.mxu0
        %v2010 = vadd.f32 %v1981, %v2009
        %v2011 = vpop.f32.mrf.mxu0
        %v2012 = vadd.f32 %v1983, %v2011
        %2013 = vmatmul.bf16.gmra.mxu0 %v1540
        %v2014 = vpop.f32.mrf.mxu0
        %v2015 = vadd.f32 %v1986, %v2014
        %v2016 = vpop.f32.mrf.mxu0
        %v2017 = vadd.f32 %v1988, %v2016
        %2018 = vdwg.mxu0
        %2019 = vmatpush.bf16.msra.mxu0 %v1867
        %2020 = vmatpush.bf16.msra.mxu0 %v1866
        %2021 = vmatpush.bf16.msra.mxu0 %v1865
        %2022 = vmatpush.bf16.msra.mxu0 %v1864
        %2023 = vmatpush.bf16.msra.mxu0 %v1863
        %2024 = vmatpush.bf16.msra.mxu0 %v1862
        %2025 = vmatpush.bf16.msra.mxu0 %v1861
        %2026 = vmatpush.bf16.msra.mxu0 %v1860
        %2027 = vmatmul.bf16.gmra.mxu0 %v1523
        %v2028 = vpop.f32.mrf.mxu0
        %v2029 = vadd.f32 %v2000, %v2028
        %v2030 = vpop.f32.mrf.mxu0
        %v2031 = vadd.f32 %v2002, %v2030
        %2032 = vmatmul.bf16.gmra.mxu0 %v1529
        %v2033 = vpop.f32.mrf.mxu0
        %v2034 = vadd.f32 %v2005, %v2033
        %v2035 = vpop.f32.mrf.mxu0
        %v2036 = vadd.f32 %v2007, %v2035
        %2037 = vmatmul.bf16.gmra.mxu0 %v1535
        %v2038 = vpop.f32.mrf.mxu0
        %v2039 = vadd.f32 %v2010, %v2038
        %v2040 = vpop.f32.mrf.mxu0
        %v2041 = vadd.f32 %v2012, %v2040
        %2042 = vmatmul.bf16.gmra.mxu0 %v1541
        %v2043 = vpop.f32.mrf.mxu0
        %v2044 = vadd.f32 %v2015, %v2043
        %v2045 = vpop.f32.mrf.mxu0
        %v2046 = vadd.f32 %v2017, %v2045
        %2047 = vdwg.mxu0
        %2048 = vmatpush.bf16.msra.mxu0 %v1875
        %2049 = vmatpush.bf16.msra.mxu0 %v1874
        %2050 = vmatpush.bf16.msra.mxu0 %v1873
        %2051 = vmatpush.bf16.msra.mxu0 %v1872
        %2052 = vmatpush.bf16.msra.mxu0 %v1871
        %2053 = vmatpush.bf16.msra.mxu0 %v1870
        %2054 = vmatpush.bf16.msra.mxu0 %v1869
        %2055 = vmatpush.bf16.msra.mxu0 %v1868
        %2056 = vmatmul.bf16.gmra.mxu0 %v1524
        %v2057 = vpop.f32.mrf.mxu0
        %v2058 = vadd.f32 %v2029, %v2057
        %v2059 = vpop.f32.mrf.mxu0
        %v2060 = vadd.f32 %v2031, %v2059
        %2061 = vmatmul.bf16.gmra.mxu0 %v1530
        %v2062 = vpop.f32.mrf.mxu0
        %v2063 = vadd.f32 %v2034, %v2062
        %v2064 = vpop.f32.mrf.mxu0
        %v2065 = vadd.f32 %v2036, %v2064
        %2066 = vmatmul.bf16.gmra.mxu0 %v1536
        %v2067 = vpop.f32.mrf.mxu0
        %v2068 = vadd.f32 %v2039, %v2067
        %v2069 = vpop.f32.mrf.mxu0
        %v2070 = vadd.f32 %v2041, %v2069
        %2071 = vmatmul.bf16.gmra.mxu0 %v1542
        %v2072 = vpop.f32.mrf.mxu0
        %v2073 = vadd.f32 %v2044, %v2072
        %v2074 = vpop.f32.mrf.mxu0
        %v2075 = vadd.f32 %v2046, %v2074
        %2076 = vdwg.mxu0
        %2077 = vmatpush.bf16.msra.mxu0 %v1883
        %2078 = vmatpush.bf16.msra.mxu0 %v1882
        %2079 = vmatpush.bf16.msra.mxu0 %v1881
        %2080 = vmatpush.bf16.msra.mxu0 %v1880
        %2081 = vmatpush.bf16.msra.mxu0 %v1879
        %2082 = vmatpush.bf16.msra.mxu0 %v1878
        %2083 = vmatpush.bf16.msra.mxu0 %v1877
        %2084 = vmatpush.bf16.msra.mxu0 %v1876
        %2085 = vmatmul.bf16.gmra.mxu0 %v1525
        %v2086 = vpop.f32.mrf.mxu0
        %v2087 = vadd.f32 %v2058, %v2086
        %v2088 = vpop.f32.mrf.mxu0
        %v2089 = vadd.f32 %v2060, %v2088
        %2090 = vmatmul.bf16.gmra.mxu0 %v1531
        %v2091 = vpop.f32.mrf.mxu0
        %v2092 = vadd.f32 %v2063, %v2091
        %v2093 = vpop.f32.mrf.mxu0
        %v2094 = vadd.f32 %v2065, %v2093
        %2095 = vmatmul.bf16.gmra.mxu0 %v1537
        %v2096 = vpop.f32.mrf.mxu0
        %v2097 = vadd.f32 %v2068, %v2096
        %v2098 = vpop.f32.mrf.mxu0
        %v2099 = vadd.f32 %v2070, %v2098
        %2100 = vmatmul.bf16.gmra.mxu0 %v1543
        %v2101 = vpop.f32.mrf.mxu0
        %v2102 = vadd.f32 %v2073, %v2101
        %v2103 = vpop.f32.mrf.mxu0
        %v2104 = vadd.f32 %v2075, %v2103
        %2105 = vdwg.mxu0
        %v2106 = vmax.f32 %v2087, 0.0
        %v2107 = vmax.f32 %v2089, 0.0
        %v2108 = vmax.f32 %v2092, 0.0
        %v2109 = vmax.f32 %v2094, 0.0
        %v2110 = vmax.f32 %v2097, 0.0
        %v2111 = vmax.f32 %v2099, 0.0
        %v2112 = vmax.f32 %v2102, 0.0
        %v2113 = vmax.f32 %v2104, 0.0
        %v2114 = vpack.c.bf16 %v2107, %v2106
        %v2115 = vpack.c.bf16 %v2109, %v2108
        %v2116 = vpack.c.bf16 %v2111, %v2110
        %v2117 = vpack.c.bf16 %v2113, %v2112
        %v2118 = vld [vmem:[#allocation8] sm:$0xf]
        %v2119 = vld [vmem:[#allocation8 + $0x4] sm:$0xf]
        %v2120 = vld [vmem:[#allocation8 + $0x8] sm:$0xf]
        %v2121 = vld [vmem:[#allocation8 + $0xc] sm:$0xf]
        %v2122 = vld [vmem:[#allocation8 + $0x10] sm:$0xf]
        %v2123 = vld [vmem:[#allocation8 + $0x14] sm:$0xf]
        %v2124 = vld [vmem:[#allocation8 + $0x18] sm:$0xf]
        %v2125 = vld [vmem:[#allocation8 + $0x1c] sm:$0xf]
        %v2126 = vld [vmem:[#allocation8 + $0x20] sm:$0xf]
        %v2127 = vld [vmem:[#allocation8 + $0x24] sm:$0xf]
        %v2128 = vld [vmem:[#allocation8 + $0x28] sm:$0xf]
        %v2129 = vld [vmem:[#allocation8 + $0x2c] sm:$0xf]
        %v2130 = vld [vmem:[#allocation8 + $0x30] sm:$0xf]
        %v2131 = vld [vmem:[#allocation8 + $0x34] sm:$0xf]
        %v2132 = vld [vmem:[#allocation8 + $0x38] sm:$0xf]
        %v2133 = vld [vmem:[#allocation8 + $0x3c] sm:$0xf]
        %v2134 = vld [vmem:[%s4] sm:$0x1]
        %v2136 = vperm.slane %v2134, 0
        %v2154 = vunpack.c.l.b16 %v2118
        %v2155 = vunpack.c.l.b16 %v2119
        %v2156 = vunpack.c.l.b16 %v2120
        %v2157 = vunpack.c.l.b16 %v2121
        %v2158 = vunpack.c.l.b16 %v2122
        %v2159 = vunpack.c.l.b16 %v2123
        %v2160 = vunpack.c.l.b16 %v2124
        %v2161 = vunpack.c.l.b16 %v2125
        %v2162 = vunpack.c.l.b16 %v2126
        %v2163 = vunpack.c.l.b16 %v2127
        %v2164 = vunpack.c.l.b16 %v2128
        %v2165 = vunpack.c.l.b16 %v2129
        %v2166 = vunpack.c.l.b16 %v2130
        %v2167 = vunpack.c.l.b16 %v2131
        %v2168 = vunpack.c.l.b16 %v2132
        %v2169 = vunpack.c.l.b16 %v2133
        %v2170 = vpack.c.b16 %v2155, %v2154
        %v2171 = vpack.c.b16 %v2157, %v2156
        %v2172 = vpack.c.b16 %v2159, %v2158
        %v2173 = vpack.c.b16 %v2161, %v2160
        %v2174 = vpack.c.b16 %v2163, %v2162
        %v2175 = vpack.c.b16 %v2165, %v2164
        %v2176 = vpack.c.b16 %v2167, %v2166
        %v2177 = vpack.c.b16 %v2169, %v2168
        %2186 = vmatpush.bf16.msra.mxu0 %v2177
        %2187 = vmatpush.bf16.msra.mxu0 %v2176
        %2188 = vmatpush.bf16.msra.mxu0 %v2175
        %2189 = vmatpush.bf16.msra.mxu0 %v2174
        %2190 = vmatpush.bf16.msra.mxu0 %v2173
        %2191 = vmatpush.bf16.msra.mxu0 %v2172
        %2192 = vmatpush.bf16.msra.mxu0 %v2171
        %2193 = vmatpush.bf16.msra.mxu0 %v2170
        %2194 = vmatmul.bf16.gmra.mxu0 %v2114
        %v2195 = vpop.f32.mrf.mxu0
        %v2196 = vadd.f32 %v2136, %v2195
        %v2197 = vpop.f32.mrf.mxu0
        %v2198 = vadd.f32 %v2136, %v2197
        %2199 = vmatmul.bf16.gmra.mxu0 %v2115
        %v2200 = vpop.f32.mrf.mxu0
        %v2201 = vadd.f32 %v2136, %v2200
        %v2202 = vpop.f32.mrf.mxu0
        %v2203 = vadd.f32 %v2136, %v2202
        %2204 = vmatmul.bf16.gmra.mxu0 %v2116
        %v2205 = vpop.f32.mrf.mxu0
        %v2206 = vadd.f32 %v2136, %v2205
        %v2207 = vpop.f32.mrf.mxu0
        %v2208 = vadd.f32 %v2136, %v2207
        %2209 = vmatmul.bf16.gmra.mxu0 %v2117
        %v2210 = vpop.f32.mrf.mxu0
        %v2211 = vadd.f32 %v2136, %v2210
        %v2212 = vpop.f32.mrf.mxu0
        %v2213 = vadd.f32 %v2136, %v2212
        %2214 = vdwg.mxu0
        %v2215 = vmax.f32 %v2196, 0.0
        %v2216 = vmax.f32 %v2198, 0.0
        %v2217 = vmax.f32 %v2201, 0.0
        %v2218 = vmax.f32 %v2203, 0.0
        %v2219 = vmax.f32 %v2206, 0.0
        %v2220 = vmax.f32 %v2208, 0.0
        %v2221 = vmax.f32 %v2211, 0.0
        %v2222 = vmax.f32 %v2213, 0.0
        %v2223 = vadd.f32 %v2215, %v2106
        %v2224 = vadd.f32 %v2216, %v2107
        %v2225 = vadd.f32 %v2217, %v2108
        %v2226 = vadd.f32 %v2218, %v2109
        %v2227 = vadd.f32 %v2219, %v2110
        %v2228 = vadd.f32 %v2220, %v2111
        %v2229 = vadd.f32 %v2221, %v2112
        %v2230 = vadd.f32 %v2222, %v2113
        %v2231 = vpack.c.bf16 %v2224, %v2223
        %v2232 = vpack.c.bf16 %v2226, %v2225
        %v2233 = vpack.c.bf16 %v2228, %v2227
        %v2234 = vpack.c.bf16 %v2230, %v2229
        %v2235 = vld [vmem:[%s1129] sm:$0xf]
        %v2236 = vld [vmem:[%s1129 + $0x4] sm:$0xf]
        %v2237 = vld [vmem:[%s1129 + $0x8] sm:$0xf]
        %v2238 = vld [vmem:[%s1129 + $0xc] sm:$0xf]
        %v2239 = vld [vmem:[%s1129 + $0x10] sm:$0xf]
        %v2240 = vld [vmem:[%s1129 + $0x14] sm:$0xf]
        %v2241 = vld [vmem:[%s1129 + $0x18] sm:$0xf]
        %v2242 = vld [vmem:[%s1129 + $0x1c] sm:$0xf]
        %v2243 = vld [vmem:[%s1129 + $0x20] sm:$0xf]
        %v2244 = vld [vmem:[%s1129 + $0x24] sm:$0xf]
        %v2245 = vld [vmem:[%s1129 + $0x28] sm:$0xf]
        %v2246 = vld [vmem:[%s1129 + $0x2c] sm:$0xf]
        %v2247 = vld [vmem:[%s1129 + $0x30] sm:$0xf]
        %v2248 = vld [vmem:[%s1129 + $0x34] sm:$0xf]
        %v2249 = vld [vmem:[%s1129 + $0x38] sm:$0xf]
        %v2250 = vld [vmem:[%s1129 + $0x3c] sm:$0xf]
        %v2251 = vld [vmem:[%s1146] sm:$0x1]
        %v2253 = vperm.slane %v2251, 0
        %v2271 = vunpack.c.l.b16 %v2235
        %v2272 = vunpack.c.l.b16 %v2236
        %v2273 = vunpack.c.l.b16 %v2237
        %v2274 = vunpack.c.l.b16 %v2238
        %v2275 = vunpack.c.l.b16 %v2239
        %v2276 = vunpack.c.l.b16 %v2240
        %v2277 = vunpack.c.l.b16 %v2241
        %v2278 = vunpack.c.l.b16 %v2242
        %v2279 = vunpack.c.l.b16 %v2243
        %v2280 = vunpack.c.l.b16 %v2244
        %v2281 = vunpack.c.l.b16 %v2245
        %v2282 = vunpack.c.l.b16 %v2246
        %v2283 = vunpack.c.l.b16 %v2247
        %v2284 = vunpack.c.l.b16 %v2248
        %v2285 = vunpack.c.l.b16 %v2249
        %v2286 = vunpack.c.l.b16 %v2250
        %v2287 = vpack.c.b16 %v2272, %v2271
        %v2288 = vpack.c.b16 %v2274, %v2273
        %v2289 = vpack.c.b16 %v2276, %v2275
        %v2290 = vpack.c.b16 %v2278, %v2277
        %v2291 = vpack.c.b16 %v2280, %v2279
        %v2292 = vpack.c.b16 %v2282, %v2281
        %v2293 = vpack.c.b16 %v2284, %v2283
        %v2294 = vpack.c.b16 %v2286, %v2285
        %2303 = vmatpush.bf16.msra.mxu0 %v2294
        %2304 = vmatpush.bf16.msra.mxu0 %v2293
        %2305 = vmatpush.bf16.msra.mxu0 %v2292
        %2306 = vmatpush.bf16.msra.mxu0 %v2291
        %2307 = vmatpush.bf16.msra.mxu0 %v2290
        %2308 = vmatpush.bf16.msra.mxu0 %v2289
        %2309 = vmatpush.bf16.msra.mxu0 %v2288
        %2310 = vmatpush.bf16.msra.mxu0 %v2287
        %2311 = vmatmul.bf16.gmra.mxu0 %v2231
        %v2312 = vpop.f32.mrf.mxu0
        %v2313 = vadd.f32 %v2253, %v2312
        %v2314 = vpop.f32.mrf.mxu0
        %v2315 = vadd.f32 %v2253, %v2314
        %2316 = vmatmul.bf16.gmra.mxu0 %v2232
        %v2317 = vpop.f32.mrf.mxu0
        %v2318 = vadd.f32 %v2253, %v2317
        %v2319 = vpop.f32.mrf.mxu0
        %v2320 = vadd.f32 %v2253, %v2319
        %2321 = vmatmul.bf16.gmra.mxu0 %v2233
        %v2322 = vpop.f32.mrf.mxu0
        %v2323 = vadd.f32 %v2253, %v2322
        %v2324 = vpop.f32.mrf.mxu0
        %v2325 = vadd.f32 %v2253, %v2324
        %2326 = vmatmul.bf16.gmra.mxu0 %v2234
        %v2327 = vpop.f32.mrf.mxu0
        %v2328 = vadd.f32 %v2253, %v2327
        %v2329 = vpop.f32.mrf.mxu0
        %v2330 = vadd.f32 %v2253, %v2329
        %2331 = vdwg.mxu0
        %v2332 = vmax.f32 %v2313, 0.0
        %v2333 = vmax.f32 %v2315, 0.0
        %v2334 = vmax.f32 %v2318, 0.0
        %v2335 = vmax.f32 %v2320, 0.0
        %v2336 = vmax.f32 %v2323, 0.0
        %v2337 = vmax.f32 %v2325, 0.0
        %v2338 = vmax.f32 %v2328, 0.0
        %v2339 = vmax.f32 %v2330, 0.0
        %v2340 = vadd.f32 %v2332, %v2223
        %v2341 = vadd.f32 %v2333, %v2224
        %v2342 = vadd.f32 %v2334, %v2225
        %v2343 = vadd.f32 %v2335, %v2226
        %v2344 = vadd.f32 %v2336, %v2227
        %v2345 = vadd.f32 %v2337, %v2228
        %v2346 = vadd.f32 %v2338, %v2229
        %v2347 = vadd.f32 %v2339, %v2230
        %v2348 = vpack.c.bf16 %v2341, %v2340
        %v2349 = vpack.c.bf16 %v2343, %v2342
        %v2350 = vpack.c.bf16 %v2345, %v2344
        %v2351 = vpack.c.bf16 %v2347, %v2346
        %v2352 = vld [vmem:[%s1248] sm:$0xf]
        %v2353 = vld [vmem:[%s1248 + $0x4] sm:$0xf]
        %v2354 = vld [vmem:[%s1248 + $0x8] sm:$0xf]
        %v2355 = vld [vmem:[%s1248 + $0xc] sm:$0xf]
        %v2356 = vld [vmem:[%s1248 + $0x10] sm:$0xf]
        %v2357 = vld [vmem:[%s1248 + $0x14] sm:$0xf]
        %v2358 = vld [vmem:[%s1248 + $0x18] sm:$0xf]
        %v2359 = vld [vmem:[%s1248 + $0x1c] sm:$0xf]
        %v2360 = vld [vmem:[%s1248 + $0x20] sm:$0xf]
        %v2361 = vld [vmem:[%s1248 + $0x24] sm:$0xf]
        %v2362 = vld [vmem:[%s1248 + $0x28] sm:$0xf]
        %v2363 = vld [vmem:[%s1248 + $0x2c] sm:$0xf]
        %v2364 = vld [vmem:[%s1248 + $0x30] sm:$0xf]
        %v2365 = vld [vmem:[%s1248 + $0x34] sm:$0xf]
        %v2366 = vld [vmem:[%s1248 + $0x38] sm:$0xf]
        %v2367 = vld [vmem:[%s1248 + $0x3c] sm:$0xf]
        %v2368 = vld [vmem:[%s1265] sm:$0x1]
        %v2370 = vperm.slane %v2368, 0
        %v2388 = vunpack.c.l.b16 %v2352
        %v2389 = vunpack.c.l.b16 %v2353
        %v2390 = vunpack.c.l.b16 %v2354
        %v2391 = vunpack.c.l.b16 %v2355
        %v2392 = vunpack.c.l.b16 %v2356
        %v2393 = vunpack.c.l.b16 %v2357
        %v2394 = vunpack.c.l.b16 %v2358
        %v2395 = vunpack.c.l.b16 %v2359
        %v2396 = vunpack.c.l.b16 %v2360
        %v2397 = vunpack.c.l.b16 %v2361
        %v2398 = vunpack.c.l.b16 %v2362
        %v2399 = vunpack.c.l.b16 %v2363
        %v2400 = vunpack.c.l.b16 %v2364
        %v2401 = vunpack.c.l.b16 %v2365
        %v2402 = vunpack.c.l.b16 %v2366
        %v2403 = vunpack.c.l.b16 %v2367
        %v2404 = vpack.c.b16 %v2389, %v2388
        %v2405 = vpack.c.b16 %v2391, %v2390
        %v2406 = vpack.c.b16 %v2393, %v2392
        %v2407 = vpack.c.b16 %v2395, %v2394
        %v2408 = vpack.c.b16 %v2397, %v2396
        %v2409 = vpack.c.b16 %v2399, %v2398
        %v2410 = vpack.c.b16 %v2401, %v2400
        %v2411 = vpack.c.b16 %v2403, %v2402
        %2420 = vmatpush.bf16.msra.mxu0 %v2411
        %2421 = vmatpush.bf16.msra.mxu0 %v2410
        %2422 = vmatpush.bf16.msra.mxu0 %v2409
        %2423 = vmatpush.bf16.msra.mxu0 %v2408
        %2424 = vmatpush.bf16.msra.mxu0 %v2407
        %2425 = vmatpush.bf16.msra.mxu0 %v2406
        %2426 = vmatpush.bf16.msra.mxu0 %v2405
        %2427 = vmatpush.bf16.msra.mxu0 %v2404
        %2428 = vmatmul.bf16.gmra.mxu0 %v2348
        %v2429 = vpop.f32.mrf.mxu0
        %v2430 = vadd.f32 %v2370, %v2429
        %v2431 = vpop.f32.mrf.mxu0
        %v2432 = vadd.f32 %v2370, %v2431
        %2433 = vmatmul.bf16.gmra.mxu0 %v2349
        %v2434 = vpop.f32.mrf.mxu0
        %v2435 = vadd.f32 %v2370, %v2434
        %v2436 = vpop.f32.mrf.mxu0
        %v2437 = vadd.f32 %v2370, %v2436
        %2438 = vmatmul.bf16.gmra.mxu0 %v2350
        %v2439 = vpop.f32.mrf.mxu0
        %v2440 = vadd.f32 %v2370, %v2439
        %v2441 = vpop.f32.mrf.mxu0
        %v2442 = vadd.f32 %v2370, %v2441
        %2443 = vmatmul.bf16.gmra.mxu0 %v2351
        %v2444 = vpop.f32.mrf.mxu0
        %v2445 = vadd.f32 %v2370, %v2444
        %v2446 = vpop.f32.mrf.mxu0
        %v2447 = vadd.f32 %v2370, %v2446
        %2448 = vdwg.mxu0
        %v2449 = vmax.f32 %v2430, 0.0
        %v2450 = vmax.f32 %v2432, 0.0
        %v2451 = vmax.f32 %v2435, 0.0
        %v2452 = vmax.f32 %v2437, 0.0
        %v2453 = vmax.f32 %v2440, 0.0
        %v2454 = vmax.f32 %v2442, 0.0
        %v2455 = vmax.f32 %v2445, 0.0
        %v2456 = vmax.f32 %v2447, 0.0
        %v2457 = vadd.f32 %v2449, %v2340
        %v2458 = vadd.f32 %v2450, %v2341
        %v2459 = vadd.f32 %v2451, %v2342
        %v2460 = vadd.f32 %v2452, %v2343
        %v2461 = vadd.f32 %v2453, %v2344
        %v2462 = vadd.f32 %v2454, %v2345
        %v2463 = vadd.f32 %v2455, %v2346
        %v2464 = vadd.f32 %v2456, %v2347
        %v2465 = vpack.c.bf16 %v2458, %v2457
        %v2466 = vpack.c.bf16 %v2460, %v2459
        %v2467 = vpack.c.bf16 %v2462, %v2461
        %v2468 = vpack.c.bf16 %v2464, %v2463
        %v2469 = vld [vmem:[#allocation10] sm:$0xf]
        %v2470 = vld [vmem:[#allocation10 + $0x4] sm:$0xf]
        %v2471 = vld [vmem:[#allocation10 + $0x8] sm:$0xf]
        %v2472 = vld [vmem:[#allocation10 + $0xc] sm:$0xf]
        %v2473 = vld [vmem:[#allocation10 + $0x10] sm:$0xf]
        %v2474 = vld [vmem:[#allocation10 + $0x14] sm:$0xf]
        %v2475 = vld [vmem:[#allocation10 + $0x18] sm:$0xf]
        %v2476 = vld [vmem:[#allocation10 + $0x1c] sm:$0xf]
        %v2477 = vld [vmem:[#allocation10 + $0x20] sm:$0xf]
        %v2478 = vld [vmem:[#allocation10 + $0x24] sm:$0xf]
        %v2479 = vld [vmem:[#allocation10 + $0x28] sm:$0xf]
        %v2480 = vld [vmem:[#allocation10 + $0x2c] sm:$0xf]
        %v2481 = vld [vmem:[#allocation10 + $0x30] sm:$0xf]
        %v2482 = vld [vmem:[#allocation10 + $0x34] sm:$0xf]
        %v2483 = vld [vmem:[#allocation10 + $0x38] sm:$0xf]
        %v2484 = vld [vmem:[#allocation10 + $0x3c] sm:$0xf]
        %v2485 = vld [vmem:[%s6] sm:$0x1]
        %v2487 = vperm.slane %v2485, 0
        %v2505 = vunpack.c.l.b16 %v2469
        %v2506 = vunpack.c.l.b16 %v2470
        %v2507 = vunpack.c.l.b16 %v2471
        %v2508 = vunpack.c.l.b16 %v2472
        %v2509 = vunpack.c.l.b16 %v2473
        %v2510 = vunpack.c.l.b16 %v2474
        %v2511 = vunpack.c.l.b16 %v2475
        %v2512 = vunpack.c.l.b16 %v2476
        %v2513 = vunpack.c.l.b16 %v2477
        %v2514 = vunpack.c.l.b16 %v2478
        %v2515 = vunpack.c.l.b16 %v2479
        %v2516 = vunpack.c.l.b16 %v2480
        %v2517 = vunpack.c.l.b16 %v2481
        %v2518 = vunpack.c.l.b16 %v2482
        %v2519 = vunpack.c.l.b16 %v2483
        %v2520 = vunpack.c.l.b16 %v2484
        %v2521 = vpack.c.b16 %v2506, %v2505
        %v2522 = vpack.c.b16 %v2508, %v2507
        %v2523 = vpack.c.b16 %v2510, %v2509
        %v2524 = vpack.c.b16 %v2512, %v2511
        %v2525 = vpack.c.b16 %v2514, %v2513
        %v2526 = vpack.c.b16 %v2516, %v2515
        %v2527 = vpack.c.b16 %v2518, %v2517
        %v2528 = vpack.c.b16 %v2520, %v2519
        %2537 = vmatpush.bf16.msra.mxu0 %v2528
        %2538 = vmatpush.bf16.msra.mxu0 %v2527
        %2539 = vmatpush.bf16.msra.mxu0 %v2526
        %2540 = vmatpush.bf16.msra.mxu0 %v2525
        %2541 = vmatpush.bf16.msra.mxu0 %v2524
        %2542 = vmatpush.bf16.msra.mxu0 %v2523
        %2543 = vmatpush.bf16.msra.mxu0 %v2522
        %2544 = vmatpush.bf16.msra.mxu0 %v2521
        %2545 = vmatmul.bf16.gmra.mxu0 %v2465
        %v2546 = vpop.f32.mrf.mxu0
        %v2547 = vadd.f32 %v2487, %v2546
        %v2548 = vpop.f32.mrf.mxu0
        %v2549 = vadd.f32 %v2487, %v2548
        %2550 = vmatmul.bf16.gmra.mxu0 %v2466
        %v2551 = vpop.f32.mrf.mxu0
        %v2552 = vadd.f32 %v2487, %v2551
        %v2553 = vpop.f32.mrf.mxu0
        %v2554 = vadd.f32 %v2487, %v2553
        %2555 = vmatmul.bf16.gmra.mxu0 %v2467
        %v2556 = vpop.f32.mrf.mxu0
        %v2557 = vadd.f32 %v2487, %v2556
        %v2558 = vpop.f32.mrf.mxu0
        %v2559 = vadd.f32 %v2487, %v2558
        %2560 = vmatmul.bf16.gmra.mxu0 %v2468
        %v2561 = vpop.f32.mrf.mxu0
        %v2562 = vadd.f32 %v2487, %v2561
        %v2563 = vpop.f32.mrf.mxu0
        %v2564 = vadd.f32 %v2487, %v2563
        %2565 = vdwg.mxu0
        %2566 = vst [vmem:[%s363 + $0x40] sm:$0xff] %v2547
        %2567 = vst [vmem:[%s363 + $0x48] sm:$0xff] %v2549
        %2568 = vst [vmem:[%s363 + $0x50] sm:$0xff] %v2552
        %2569 = vst [vmem:[%s363 + $0x58] sm:$0xff] %v2554
        %2570 = vst [vmem:[%s363 + $0x60] sm:$0xff] %v2557
        %2571 = vst [vmem:[%s363 + $0x68] sm:$0xff] %v2559
        %2572 = vst [vmem:[%s363 + $0x70] sm:$0xff] %v2562
        %2573 = vst [vmem:[%s363 + $0x78] sm:$0xff] %v2564
        %s2574 = sand.u32 %s186, 1
        %s2575 = scalar_lea.sflag [#allocation4], %s2574
        %s2576 = sand.u32 %s186, 1
        %s2577 = smul.addr %s2576, 128
        %s2578 = scalar_lea.vmem [#allocation11], %s2577
        // Predicated region
        $region69: #{tpu_custom_call.1} parent=47 // pred_check
          %p2579 = pneg %p196
        $region70: #{tpu_custom_call.1} parent=47 // pred_check_branch
          %2581 = sbr.rel (%p2579) target = $region72
        $region71: #{tpu_custom_call.1} parent=47 // pred_region
          %s2582 = smul.u32 16, %s26
          %2584 = vsyncadd %s2575, 0
          %s2585 = smul.addr %s2582, 8
          %s2586 = scalar_lea.hbm %s7, %s2585
          %s2587 = sshll.u32 %s2578, 4
          %s2588 = int_to_ptr.vmem [resolvable:$true] %s2587
          %s2589 = sshll.u32 %s2586, 4
          %s2590 = int_to_ptr.hbm [resolvable:$true] %s2589
          %2595 = dma.vmem_to_hbm [thread:$0]  %s2588, 2048, %s2590, %s2575, 128, 128, 8
        $region72: #{tpu_custom_call.1} parent=47 // pred_fallthru
          _
      $region48: #{tpu_custom_call.1} parent=5 // pred_fallthru
        _
      %p2596 = scmp.le.s32.totalorder 2, %s21
      // Predicated region
      $region73: #{tpu_custom_call.1} parent=5 // pred_check
        %p2597 = pneg %p2596
      $region74: #{tpu_custom_call.1} parent=5 // pred_check_branch
        %2599 = sbr.rel (%p2597) target = $region76
      $region75: #{tpu_custom_call.1} parent=5 // pred_region
        %s2600 = ssub.s32 %s21, 2
        // Predicated region
        $region77: #{tpu_custom_call.1} parent=75 // pred_check
          %p2601 = pneg %p202
        $region78: #{tpu_custom_call.1} parent=75 // pred_check_branch
          %2603 = sbr.rel (%p2601) target = $region80
        $region79: #{tpu_custom_call.1} parent=75 // pred_region
          %s2604 = sand.u32 %s187, 1
          %s2605 = scalar_lea.sflag [#allocation4], %s2604
          %s2606 = sand.u32 %s187, 1
          %s2607 = smul.addr %s2606, 128
          %s2608 = scalar_lea.vmem [#allocation11], %s2607
          %2610 = dma.done %s2605, 2048
        $region80: #{tpu_custom_call.1} parent=75 // pred_fallthru
          _
      $region76: #{tpu_custom_call.1} parent=5 // pred_fallthru
        _
    $region6: #{tpu_custom_call.1} parent=1 // loop_footer
      %s25 = sadd.s32 1, %s21
    $region7: #{tpu_custom_call.1} parent=1 // loop_footer_branch
      %20 = sbr.rel target = $region3
    $region8: #{tpu_custom_call.1} parent=1 // loop_exit
      _
    %2611 = vsyncpa [#allocation3], 1
    %s2612 = scalar_lea.sflag [#allocation3], 1
    %2613 = vsyncpa %s2612, 1
    %2614 = vsyncpa [#allocation6], 1
    %2615 = vsyncpa [#allocation9], 1
    %2616 = vsyncpa [#allocation4], 1
    %s2617 = scalar_lea.sflag [#allocation4], 1
    %2618 = vsyncpa %s2617, 1

</llo_original>
